<compile_context>
chip_gen: v7x
topology: tpu7x:2x2x1
jax: 0.10.0
libtpu: 0.0.40
codegen_flags: <defaults>
</compile_context>

<pallas_src>
import functools

import jax
import jax.numpy as jnp
from jax.experimental import pallas as pl
from jax.experimental.pallas import tpu as pltpu

# ----------------------------------------------------------------------------
# Synthetic small config (shapes implied by the module's __init__)
# ----------------------------------------------------------------------------
CONFIG = dict(
    hidden_size=128,
    num_attention_heads=4,
    num_key_value_heads=2,
    head_dim=64,
    attention_bias=False,
    attention_dropout=0.0,
    rope_theta=10000.0,
)
MAX_BS = 1
SEQ_LEN = 16
START_POS = 0


def _rotate_half(t):
    d = t.shape[-1] // 2
    return jnp.concatenate([-t[..., d:], t[..., :d]], axis=-1)


# ----------------------------------------------------------------------------
# Pallas kernel: one fused invocation (no grid)
# ----------------------------------------------------------------------------
def _attn_kernel(x_ref, w_ref, wot_ref, cs_ref, o_ref, *,
                 num_heads, num_kv_heads, head_dim):
    groups = num_heads // num_kv_heads
    qdim = num_heads * head_dim          # 256
    kdim = num_kv_heads * head_dim       # 128

    x = x_ref[...]                       # (S, H) bf16
    seq = x.shape[0]

    # One fused projection for [q | rotate_half(q) | k | rotate_half(k) | v].
    # All column offsets below are 128-lane aligned.
    proj = jnp.dot(x, w_ref[...], preferred_element_type=jnp.float32)  # (S, 896) f32

    q_off, qr_off = 0, qdim
    k_off, kr_off, v_off = 2 * qdim, 2 * qdim + kdim, 2 * qdim + 2 * kdim

    cs = cs_ref[...]                     # (S, 2*qdim) f32 = [cos | sin], head-tiled
    cos_q = cs[:, :qdim]
    sin_q = cs[:, qdim:2 * qdim]
    cos_k = cos_q[:, :kdim]              # per-head tables are identical -> reuse
    sin_k = sin_q[:, :kdim]

    # RoPE as two FMAs (rotation + attention scaling already folded into W).
    q = proj[:, q_off:q_off + qdim] * cos_q + proj[:, qr_off:qr_off + qdim] * sin_q
    k = proj[:, k_off:k_off + kdim] * cos_k + proj[:, kr_off:kr_off + kdim] * sin_k
    v = proj[:, v_off:v_off + kdim]

    # Causal additive bias, built once per call (prefill, start_pos == 0).
    # TODO(synk): decode path needs a key-position offset + KV-cache reads.
    row = jax.lax.broadcasted_iota(jnp.int32, (seq, seq), 0)
    col = jax.lax.broadcasted_iota(jnp.int32, (seq, seq), 1)
    bias = jnp.where(col <= row, jnp.float32(0.0), jnp.float32(-1e30))

    # bf16 MXU operands, f32 accumulation / softmax math.
    q_bf = q.astype(jnp.bfloat16)
    k_bf = k.astype(jnp.bfloat16)
    v_bf = v.astype(jnp.bfloat16)
    wot = wot_ref[...]                   # (nH*hd, H) bf16

    # Per-head attention (static unrolled loop; nH is tiny).  GQA: query head
    # h reads kv head h // groups directly -- no materialized repeat_kv.
    # Output projection is accumulated per head (K = head_dim), so no 64-lane
    # concatenation ever happens; the only store is the (S, H) output tile.
    out_acc = jnp.zeros((seq, o_ref.shape[-1]), jnp.float32)
    for h in range(num_heads):
        g = h // groups
        qh = q_bf[:, h * head_dim:(h + 1) * head_dim]               # (S, hd)
        kh = k_bf[:, g * head_dim:(g + 1) * head_dim]               # (S, hd)
        vh = v_bf[:, g * head_dim:(g + 1) * head_dim]               # (S, hd)

        # Contract last dim vs last dim -> no kh.T relayout.
        s = jax.lax.dot_general(qh, kh, (((1,), (1,)), ((), ())),
                                preferred_element_type=jnp.float32)  # (S, S)
        s = s + bias
        m = jnp.max(s, axis=-1, keepdims=True)
        p = jnp.exp(s - m)
        l = jnp.sum(p, axis=-1, keepdims=True)
        acc = jnp.dot(p.astype(jnp.bfloat16), vh,
                      preferred_element_type=jnp.float32)            # (S, hd), unnormalized
        acc = acc * pl.reciprocal(l, approx=True)                    # EUP recip
        out_acc = out_acc + jnp.dot(
            acc.astype(jnp.bfloat16), wot[h * head_dim:(h + 1) * head_dim, :],
            preferred_element_type=jnp.float32)                      # (S, H)

    o_ref[...] = out_acc.astype(o_ref.dtype)


# ----------------------------------------------------------------------------
# Wrapper (parameter packing only; all compute is in the kernel)
# ----------------------------------------------------------------------------
def llama_attention_pallas(hidden_states, params, cos, sin):
    B, S, H = hidden_states.shape
    assert B == MAX_BS == 1
    nH = CONFIG["num_attention_heads"]
    nKV = CONFIG["num_key_value_heads"]
    hd = CONFIG["head_dim"]
    half = hd // 2
    scaling = hd ** (-0.5)               # 0.125: exact power of two, bf16-safe

    # torch Linear weights are (out, in); transpose for x @ W layout.
    wqt = params["wq"].T                 # (H, nH*hd)  f32
    wkt = params["wk"].T                 # (H, nKV*hd) f32
    wvt = params["wv"].T                 # (H, nKV*hd) f32
    wot = params["wo"].T.astype(jnp.bfloat16)   # (nH*hd, H)

    def rotate_cols(w_t, n_heads):
        # Returns W' such that x @ W' == rotate_half(x @ w_t) per head.
        w3 = w_t.reshape(H, n_heads, hd)
        w3r = jnp.concatenate([-w3[..., half:], w3[..., :half]], axis=-1)
        return w3r.reshape(H, n_heads * hd)

    # One bf16 weight slab: [Wq*scale | Wq_rot*scale | Wk | Wk_rot | Wv].
    w_slab = jnp.concatenate(
        [wqt * scaling,
         rotate_cols(wqt, nH) * scaling,
         wkt,
         rotate_cols(wkt, nKV),
         wvt], axis=1).astype(jnp.bfloat16)          # (H, 2*nH*hd + 3*nKV*hd) = (128, 896)

    # Shared cos/sin slab (head-tiled once, q-width; k reuses the first nKV*hd cols).
    cs_slab = jnp.concatenate(
        [jnp.tile(cos, (1, nH)), jnp.tile(sin, (1, nH))], axis=1)    # (S, 2*nH*hd) f32

    x2 = hidden_states.reshape(B * S, H).astype(jnp.bfloat16)

    vmem = pl.BlockSpec(memory_space=pltpu.MemorySpace.VMEM)
    out = pl.pallas_call(
        functools.partial(_attn_kernel, num_heads=nH, num_kv_heads=nKV,
                          head_dim=hd),
        out_shape=jax.ShapeDtypeStruct((B * S, H), hidden_states.dtype),
        in_specs=[vmem] * 4,
        out_specs=vmem,
    )(x2, w_slab, wot, cs_slab)
    return out.reshape(B, S, H)


# ----------------------------------------------------------------------------
# Pure-JAX reference (mirrors the PyTorch forward semantics exactly)
# ----------------------------------------------------------------------------
def llama_attention_ref(hidden_states, params, cos, sin):
    B, S, H = hidden_states.shape
    nH = CONFIG["num_attention_heads"]
    nKV = CONFIG["num_key_value_heads"]
    hd = CONFIG["head_dim"]
    groups = nH // nKV
    scaling = hd ** (-0.5)

    q = (hidden_states @ params["wq"].T).reshape(B, S, nH, hd).transpose(0, 2, 1, 3)
    k = (hidden_states @ params["wk"].T).reshape(B, S, nKV, hd).transpose(0, 2, 1, 3)
    v = (hidden_states @ params["wv"].T).reshape(B, S, nKV, hd).transpose(0, 2, 1, 3)

    cos_b = cos[None, None]
    sin_b = sin[None, None]
    q = q * cos_b + _rotate_half(q) * sin_b
    k = k * cos_b + _rotate_half(k) * sin_b

    k = jnp.repeat(k, groups, axis=1)     # repeat_kv
    v = jnp.repeat(v, groups, axis=1)

    s = jnp.einsum("bhqd,bhkd->bhqk", q, k) * scaling
    causal = jnp.tril(jnp.ones((S, S), dtype=bool))
    s = jnp.where(causal[None, None], s, -jnp.inf)
    p = jax.nn.softmax(s, axis=-1)
    o = jnp.einsum("bhqk,bhkd->bhqd", p, v)
    o = o.transpose(0, 2, 1, 3).reshape(B, S, nH * hd)
    return o @ params["wo"].T


# ----------------------------------------------------------------------------
# Main
# ----------------------------------------------------------------------------
if __name__ == "__main__":
    H = CONFIG["hidden_size"]
    nH = CONFIG["num_attention_heads"]
    nKV = CONFIG["num_key_value_heads"]
    hd = CONFIG["head_dim"]

    key = jax.random.PRNGKey(0)
    kq, kk, kv, ko, kx = jax.random.split(key, 5)
    params = {
        "wq": 0.02 * jax.random.normal(kq, (nH * hd, H), jnp.float32),
        "wk": 0.02 * jax.random.normal(kk, (nKV * hd, H), jnp.float32),
        "wv": 0.02 * jax.random.normal(kv, (nKV * hd, H), jnp.float32),
        "wo": 0.02 * jax.random.normal(ko, (H, nH * hd), jnp.float32),
    }

    # rotary position embeddings for positions [START_POS, START_POS + S)
    inv_freq = 1.0 / (CONFIG["rope_theta"] ** (jnp.arange(0, hd, 2, dtype=jnp.float32) / hd))
    pos = jnp.arange(START_POS, START_POS + SEQ_LEN, dtype=jnp.float32)
    freqs = pos[:, None] * inv_freq[None, :]          # (S, hd/2)
    emb = jnp.concatenate([freqs, freqs], axis=-1)    # (S, hd)
    cos = jnp.cos(emb)
    sin = jnp.sin(emb)

    x = jax.random.normal(kx, (MAX_BS, SEQ_LEN, H), jnp.float32)

    out = llama_attention_pallas(x, params, cos, sin)
    out = jax.block_until_ready(out)

    ref = llama_attention_ref(x, params, cos, sin)
    assert out.shape == (MAX_BS, SEQ_LEN, H)
    if not jnp.allclose(out, ref, atol=5e-3, rtol=5e-3):
        raise AssertionError(
            f"mismatch vs reference, max abs err = {float(jnp.max(jnp.abs(out - ref)))}"
        )
    print("KERNEL_OK")
</pallas_src>

<mosaic_0001>
module attributes {stable_mosaic.version = 11 : i64} {
  func.func @_attn_kernel(%arg0: memref<16x128xbf16, #tpu.memory_space<vmem>>, %arg1: memref<128x896xbf16, #tpu.memory_space<vmem>>, %arg2: memref<256x128xbf16, #tpu.memory_space<vmem>>, %arg3: memref<16x512xf32, #tpu.memory_space<vmem>>, %arg4: memref<16x128xf32, #tpu.memory_space<vmem>>) attributes {dimension_semantics = [], scalar_prefetch = 0 : i64, scratch_operands = 0 : i64, tpu.core_type = #tpu.core_type<tc>} {
    %c0 = arith.constant 0 : index
    %c0_0 = arith.constant 0 : index
    %0 = vector.load %arg0[%c0, %c0_0] : memref<16x128xbf16, #tpu.memory_space<vmem>>, vector<16x128xbf16>
    %c0_1 = arith.constant 0 : index
    %c0_2 = arith.constant 0 : index
    %1 = vector.load %arg1[%c0_1, %c0_2] : memref<128x896xbf16, #tpu.memory_space<vmem>>, vector<128x896xbf16>
    %cst = arith.constant dense<0.000000e+00> : vector<16x896xf32>
    %2 = tpu.matmul %0, %1, %cst {dimension_numbers = #tpu.dot_dimension_numbers<[1], [0], [0], [1], [0, 0, 1, 1], [], []>} : vector<16x128xbf16>, vector<128x896xbf16>, vector<16x896xf32> -> vector<16x896xf32>
    %c0_3 = arith.constant 0 : index
    %c0_4 = arith.constant 0 : index
    %3 = vector.load %arg3[%c0_3, %c0_4] : memref<16x512xf32, #tpu.memory_space<vmem>>, vector<16x512xf32>
    %4 = vector.extract_strided_slice %3 {offsets = [0, 0], sizes = [16, 256], strides = [1, 1]} : vector<16x512xf32> to vector<16x256xf32>
    %5 = vector.extract_strided_slice %3 {offsets = [0, 256], sizes = [16, 256], strides = [1, 1]} : vector<16x512xf32> to vector<16x256xf32>
    %6 = vector.extract_strided_slice %4 {offsets = [0, 0], sizes = [16, 128], strides = [1, 1]} : vector<16x256xf32> to vector<16x128xf32>
    %7 = vector.extract_strided_slice %5 {offsets = [0, 0], sizes = [16, 128], strides = [1, 1]} : vector<16x256xf32> to vector<16x128xf32>
    %8 = vector.extract_strided_slice %2 {offsets = [0, 0], sizes = [16, 256], strides = [1, 1]} : vector<16x896xf32> to vector<16x256xf32>
    %9 = arith.mulf %8, %4 : vector<16x256xf32>
    %10 = vector.extract_strided_slice %2 {offsets = [0, 256], sizes = [16, 256], strides = [1, 1]} : vector<16x896xf32> to vector<16x256xf32>
    %11 = arith.mulf %10, %5 : vector<16x256xf32>
    %12 = arith.addf %9, %11 : vector<16x256xf32>
    %13 = vector.extract_strided_slice %2 {offsets = [0, 512], sizes = [16, 128], strides = [1, 1]} : vector<16x896xf32> to vector<16x128xf32>
    %14 = arith.mulf %13, %6 : vector<16x128xf32>
    %15 = vector.extract_strided_slice %2 {offsets = [0, 640], sizes = [16, 128], strides = [1, 1]} : vector<16x896xf32> to vector<16x128xf32>
    %16 = arith.mulf %15, %7 : vector<16x128xf32>
    %17 = arith.addf %14, %16 : vector<16x128xf32>
    %18 = vector.extract_strided_slice %2 {offsets = [0, 768], sizes = [16, 128], strides = [1, 1]} : vector<16x896xf32> to vector<16x128xf32>
    %19 = tpu.iota {dimensions = array<i32: 0>} : vector<16x16xi32>
    %20 = tpu.iota {dimensions = array<i32: 1>} : vector<16x16xi32>
    %21 = arith.cmpi sle, %20, %19 : vector<16x16xi32>
    %cst_5 = arith.constant 0.000000e+00 : f32
    %cst_6 = arith.constant -1.000000e+30 : f32
    %22 = vector.broadcast %cst_5 : f32 to vector<16x16xf32>
    %23 = vector.broadcast %cst_6 : f32 to vector<16x16xf32>
    %24 = arith.select %21, %22, %23 : vector<16x16xi1>, vector<16x16xf32>
    %25 = arith.truncf %12 : vector<16x256xf32> to vector<16x256xbf16>
    %26 = arith.truncf %17 : vector<16x128xf32> to vector<16x128xbf16>
    %27 = arith.truncf %18 : vector<16x128xf32> to vector<16x128xbf16>
    %c0_7 = arith.constant 0 : index
    %c0_8 = arith.constant 0 : index
    %28 = vector.load %arg2[%c0_7, %c0_8] : memref<256x128xbf16, #tpu.memory_space<vmem>>, vector<256x128xbf16>
    %cst_9 = arith.constant 0.000000e+00 : f32
    %29 = vector.broadcast %cst_9 : f32 to vector<16x128xf32>
    %30 = vector.extract_strided_slice %25 {offsets = [0, 0], sizes = [16, 64], strides = [1, 1]} : vector<16x256xbf16> to vector<16x64xbf16>
    %31 = vector.extract_strided_slice %26 {offsets = [0, 0], sizes = [16, 64], strides = [1, 1]} : vector<16x128xbf16> to vector<16x64xbf16>
    %32 = vector.extract_strided_slice %27 {offsets = [0, 0], sizes = [16, 64], strides = [1, 1]} : vector<16x128xbf16> to vector<16x64xbf16>
    %cst_10 = arith.constant dense<0.000000e+00> : vector<16x16xf32>
    %33 = tpu.matmul %30, %31, %cst_10 {dimension_numbers = #tpu.dot_dimension_numbers<[1], [1], [0], [0], [0, 0, 1, 0], [], []>} : vector<16x64xbf16>, vector<16x64xbf16>, vector<16x16xf32> -> vector<16x16xf32>
    %34 = arith.addf %33, %24 : vector<16x16xf32>
    %cst_11 = arith.constant dense<0xFF800000> : vector<16xf32>
    %35 = vector.multi_reduction <maximumf>, %34, %cst_11 [1] : vector<16x16xf32> to vector<16xf32>
    %36 = vector.shape_cast %35 : vector<16xf32> to vector<16x1xf32>
    %37 = vector.broadcast %36 : vector<16x1xf32> to vector<16x16xf32>
    %38 = arith.subf %34, %37 : vector<16x16xf32>
    %39 = math.exp %38 : vector<16x16xf32>
    %cst_12 = arith.constant dense<0.000000e+00> : vector<16xf32>
    %40 = vector.multi_reduction <add>, %39, %cst_12 [1] : vector<16x16xf32> to vector<16xf32>
    %41 = vector.shape_cast %40 : vector<16xf32> to vector<16x1xf32>
    %42 = arith.truncf %39 : vector<16x16xf32> to vector<16x16xbf16>
    %cst_13 = arith.constant dense<0.000000e+00> : vector<16x64xf32>
    %43 = tpu.matmul %42, %32, %cst_13 {dimension_numbers = #tpu.dot_dimension_numbers<[1], [0], [0], [1], [0, 0, 1, 1], [], []>} : vector<16x16xbf16>, vector<16x64xbf16>, vector<16x64xf32> -> vector<16x64xf32>
    %44 = tpu.reciprocal %41 {approx = true} : vector<16x1xf32> -> vector<16x1xf32>
    %45 = vector.broadcast %44 : vector<16x1xf32> to vector<16x64xf32>
    %46 = arith.mulf %43, %45 : vector<16x64xf32>
    %47 = arith.truncf %46 : vector<16x64xf32> to vector<16x64xbf16>
    %48 = vector.extract_strided_slice %28 {offsets = [0, 0], sizes = [64, 128], strides = [1, 1]} : vector<256x128xbf16> to vector<64x128xbf16>
    %cst_14 = arith.constant dense<0.000000e+00> : vector<16x128xf32>
    %49 = tpu.matmul %47, %48, %cst_14 {dimension_numbers = #tpu.dot_dimension_numbers<[1], [0], [0], [1], [0, 0, 1, 1], [], []>} : vector<16x64xbf16>, vector<64x128xbf16>, vector<16x128xf32> -> vector<16x128xf32>
    %50 = arith.addf %29, %49 : vector<16x128xf32>
    %51 = vector.extract_strided_slice %25 {offsets = [0, 64], sizes = [16, 64], strides = [1, 1]} : vector<16x256xbf16> to vector<16x64xbf16>
    %52 = vector.extract_strided_slice %26 {offsets = [0, 0], sizes = [16, 64], strides = [1, 1]} : vector<16x128xbf16> to vector<16x64xbf16>
    %53 = vector.extract_strided_slice %27 {offsets = [0, 0], sizes = [16, 64], strides = [1, 1]} : vector<16x128xbf16> to vector<16x64xbf16>
    %cst_15 = arith.constant dense<0.000000e+00> : vector<16x16xf32>
    %54 = tpu.matmul %51, %52, %cst_15 {dimension_numbers = #tpu.dot_dimension_numbers<[1], [1], [0], [0], [0, 0, 1, 0], [], []>} : vector<16x64xbf16>, vector<16x64xbf16>, vector<16x16xf32> -> vector<16x16xf32>
    %55 = arith.addf %54, %24 : vector<16x16xf32>
    %cst_16 = arith.constant dense<0xFF800000> : vector<16xf32>
    %56 = vector.multi_reduction <maximumf>, %55, %cst_16 [1] : vector<16x16xf32> to vector<16xf32>
    %57 = vector.shape_cast %56 : vector<16xf32> to vector<16x1xf32>
    %58 = vector.broadcast %57 : vector<16x1xf32> to vector<16x16xf32>
    %59 = arith.subf %55, %58 : vector<16x16xf32>
    %60 = math.exp %59 : vector<16x16xf32>
    %cst_17 = arith.constant dense<0.000000e+00> : vector<16xf32>
    %61 = vector.multi_reduction <add>, %60, %cst_17 [1] : vector<16x16xf32> to vector<16xf32>
    %62 = vector.shape_cast %61 : vector<16xf32> to vector<16x1xf32>
    %63 = arith.truncf %60 : vector<16x16xf32> to vector<16x16xbf16>
    %cst_18 = arith.constant dense<0.000000e+00> : vector<16x64xf32>
    %64 = tpu.matmul %63, %53, %cst_18 {dimension_numbers = #tpu.dot_dimension_numbers<[1], [0], [0], [1], [0, 0, 1, 1], [], []>} : vector<16x16xbf16>, vector<16x64xbf16>, vector<16x64xf32> -> vector<16x64xf32>
    %65 = tpu.reciprocal %62 {approx = true} : vector<16x1xf32> -> vector<16x1xf32>
    %66 = vector.broadcast %65 : vector<16x1xf32> to vector<16x64xf32>
    %67 = arith.mulf %64, %66 : vector<16x64xf32>
    %68 = arith.truncf %67 : vector<16x64xf32> to vector<16x64xbf16>
    %69 = vector.extract_strided_slice %28 {offsets = [64, 0], sizes = [64, 128], strides = [1, 1]} : vector<256x128xbf16> to vector<64x128xbf16>
    %cst_19 = arith.constant dense<0.000000e+00> : vector<16x128xf32>
    %70 = tpu.matmul %68, %69, %cst_19 {dimension_numbers = #tpu.dot_dimension_numbers<[1], [0], [0], [1], [0, 0, 1, 1], [], []>} : vector<16x64xbf16>, vector<64x128xbf16>, vector<16x128xf32> -> vector<16x128xf32>
    %71 = arith.addf %50, %70 : vector<16x128xf32>
    %72 = vector.extract_strided_slice %25 {offsets = [0, 128], sizes = [16, 64], strides = [1, 1]} : vector<16x256xbf16> to vector<16x64xbf16>
    %73 = vector.extract_strided_slice %26 {offsets = [0, 64], sizes = [16, 64], strides = [1, 1]} : vector<16x128xbf16> to vector<16x64xbf16>
    %74 = vector.extract_strided_slice %27 {offsets = [0, 64], sizes = [16, 64], strides = [1, 1]} : vector<16x128xbf16> to vector<16x64xbf16>
    %cst_20 = arith.constant dense<0.000000e+00> : vector<16x16xf32>
    %75 = tpu.matmul %72, %73, %cst_20 {dimension_numbers = #tpu.dot_dimension_numbers<[1], [1], [0], [0], [0, 0, 1, 0], [], []>} : vector<16x64xbf16>, vector<16x64xbf16>, vector<16x16xf32> -> vector<16x16xf32>
    %76 = arith.addf %75, %24 : vector<16x16xf32>
    %cst_21 = arith.constant dense<0xFF800000> : vector<16xf32>
    %77 = vector.multi_reduction <maximumf>, %76, %cst_21 [1] : vector<16x16xf32> to vector<16xf32>
    %78 = vector.shape_cast %77 : vector<16xf32> to vector<16x1xf32>
    %79 = vector.broadcast %78 : vector<16x1xf32> to vector<16x16xf32>
    %80 = arith.subf %76, %79 : vector<16x16xf32>
    %81 = math.exp %80 : vector<16x16xf32>
    %cst_22 = arith.constant dense<0.000000e+00> : vector<16xf32>
    %82 = vector.multi_reduction <add>, %81, %cst_22 [1] : vector<16x16xf32> to vector<16xf32>
    %83 = vector.shape_cast %82 : vector<16xf32> to vector<16x1xf32>
    %84 = arith.truncf %81 : vector<16x16xf32> to vector<16x16xbf16>
    %cst_23 = arith.constant dense<0.000000e+00> : vector<16x64xf32>
    %85 = tpu.matmul %84, %74, %cst_23 {dimension_numbers = #tpu.dot_dimension_numbers<[1], [0], [0], [1], [0, 0, 1, 1], [], []>} : vector<16x16xbf16>, vector<16x64xbf16>, vector<16x64xf32> -> vector<16x64xf32>
    %86 = tpu.reciprocal %83 {approx = true} : vector<16x1xf32> -> vector<16x1xf32>
    %87 = vector.broadcast %86 : vector<16x1xf32> to vector<16x64xf32>
    %88 = arith.mulf %85, %87 : vector<16x64xf32>
    %89 = arith.truncf %88 : vector<16x64xf32> to vector<16x64xbf16>
    %90 = vector.extract_strided_slice %28 {offsets = [128, 0], sizes = [64, 128], strides = [1, 1]} : vector<256x128xbf16> to vector<64x128xbf16>
    %cst_24 = arith.constant dense<0.000000e+00> : vector<16x128xf32>
    %91 = tpu.matmul %89, %90, %cst_24 {dimension_numbers = #tpu.dot_dimension_numbers<[1], [0], [0], [1], [0, 0, 1, 1], [], []>} : vector<16x64xbf16>, vector<64x128xbf16>, vector<16x128xf32> -> vector<16x128xf32>
    %92 = arith.addf %71, %91 : vector<16x128xf32>
    %93 = vector.extract_strided_slice %25 {offsets = [0, 192], sizes = [16, 64], strides = [1, 1]} : vector<16x256xbf16> to vector<16x64xbf16>
    %94 = vector.extract_strided_slice %26 {offsets = [0, 64], sizes = [16, 64], strides = [1, 1]} : vector<16x128xbf16> to vector<16x64xbf16>
    %95 = vector.extract_strided_slice %27 {offsets = [0, 64], sizes = [16, 64], strides = [1, 1]} : vector<16x128xbf16> to vector<16x64xbf16>
    %cst_25 = arith.constant dense<0.000000e+00> : vector<16x16xf32>
    %96 = tpu.matmul %93, %94, %cst_25 {dimension_numbers = #tpu.dot_dimension_numbers<[1], [1], [0], [0], [0, 0, 1, 0], [], []>} : vector<16x64xbf16>, vector<16x64xbf16>, vector<16x16xf32> -> vector<16x16xf32>
    %97 = arith.addf %96, %24 : vector<16x16xf32>
    %cst_26 = arith.constant dense<0xFF800000> : vector<16xf32>
    %98 = vector.multi_reduction <maximumf>, %97, %cst_26 [1] : vector<16x16xf32> to vector<16xf32>
    %99 = vector.shape_cast %98 : vector<16xf32> to vector<16x1xf32>
    %100 = vector.broadcast %99 : vector<16x1xf32> to vector<16x16xf32>
    %101 = arith.subf %97, %100 : vector<16x16xf32>
    %102 = math.exp %101 : vector<16x16xf32>
    %cst_27 = arith.constant dense<0.000000e+00> : vector<16xf32>
    %103 = vector.multi_reduction <add>, %102, %cst_27 [1] : vector<16x16xf32> to vector<16xf32>
    %104 = vector.shape_cast %103 : vector<16xf32> to vector<16x1xf32>
    %105 = arith.truncf %102 : vector<16x16xf32> to vector<16x16xbf16>
    %cst_28 = arith.constant dense<0.000000e+00> : vector<16x64xf32>
    %106 = tpu.matmul %105, %95, %cst_28 {dimension_numbers = #tpu.dot_dimension_numbers<[1], [0], [0], [1], [0, 0, 1, 1], [], []>} : vector<16x16xbf16>, vector<16x64xbf16>, vector<16x64xf32> -> vector<16x64xf32>
    %107 = tpu.reciprocal %104 {approx = true} : vector<16x1xf32> -> vector<16x1xf32>
    %108 = vector.broadcast %107 : vector<16x1xf32> to vector<16x64xf32>
    %109 = arith.mulf %106, %108 : vector<16x64xf32>
    %110 = arith.truncf %109 : vector<16x64xf32> to vector<16x64xbf16>
    %111 = vector.extract_strided_slice %28 {offsets = [192, 0], sizes = [64, 128], strides = [1, 1]} : vector<256x128xbf16> to vector<64x128xbf16>
    %cst_29 = arith.constant dense<0.000000e+00> : vector<16x128xf32>
    %112 = tpu.matmul %110, %111, %cst_29 {dimension_numbers = #tpu.dot_dimension_numbers<[1], [0], [0], [1], [0, 0, 1, 1], [], []>} : vector<16x64xbf16>, vector<64x128xbf16>, vector<16x128xf32> -> vector<16x128xf32>
    %113 = arith.addf %92, %112 : vector<16x128xf32>
    %c0_30 = arith.constant 0 : index
    %c0_31 = arith.constant 0 : index
    %114 = vector.load %arg4[%c0_30, %c0_31] : memref<16x128xf32, #tpu.memory_space<vmem>>, vector<16x128xf32>
    tpu.vector_store %arg4[%c0_30, %c0_31], %113 {strides = array<i32>} : memref<16x128xf32, #tpu.memory_space<vmem>>, vector<16x128xf32>,
    return
  }
}

</mosaic_0001>

<llo_original>
// kernel: tpu_custom_call.1
$region0: #{tpu_custom_call.1}
  #allocation0 [shape = 'u32[]', space=smem, size = 0x4, offset = 0x4, fixed_abs, tag = 'smem constant byte address 0x4 - core index']
  #allocation1 [shape = 'u32[144,128]{1,0:T(1,128)}', space=vmem, size = 0x12000, scoped, tag = 'internal scratch']
  %s0 = inlined_call_operand.hbm [shape: bf16[16,128], index: 0, kind: input, shape index: {}]
  %s1 = inlined_call_operand.hbm [shape: bf16[128,896], index: 1, kind: input, shape index: {}]
  %s2 = inlined_call_operand.hbm [shape: bf16[256,128], index: 2, kind: input, shape index: {}]
  %s3 = inlined_call_operand.hbm [shape: f32[16,512], index: 3, kind: input, shape index: {}]
  %s4 = inlined_call_operand.hbm [shape: f32[16,128], index: 4, kind: output, shape index: {}]
  %s5 = sld [smem:[#allocation0]]
  $region42: #{tpu_custom_call.1} parent=0
    _
  %s7 = ssub.s32 1, %s5
  %s8 = scalar_select 0, %s7, %s5
  $region1: #{tpu_custom_call.1} parent=0
    #allocation2 [shape = 'u8[4096]{0}', space=vmem, size = 0x1000, scoped, tag = 'input window, operand 0, single buffered']
    #allocation3 [shape = 's32[1]{0}', space=sflag, size = 0x4, scoped, tag = 'scoped memory for tpu_custom_call.1']
    #allocation4 [shape = 's32[1]{0}', space=sflag, size = 0x4, scoped, tag = 'scoped memory for tpu_custom_call.1']
    #allocation5 [shape = 'u8[229376]{0}', space=vmem, size = 0x38000, scoped, tag = 'input window, operand 1, single buffered']
    #allocation6 [shape = 's32[1]{0}', space=sflag, size = 0x4, scoped, tag = 'scoped memory for tpu_custom_call.1']
    #allocation7 [shape = 'u8[65536]{0}', space=vmem, size = 0x10000, scoped, tag = 'input window, operand 2, single buffered']
    #allocation8 [shape = 'u8[32768]{0}', space=vmem, size = 0x8000, scoped, tag = 'input window, operand 3, single buffered']
    #allocation9 [shape = 's32[1]{0}', space=sflag, size = 0x4, scoped, tag = 'scoped memory for tpu_custom_call.1']
    #allocation10 [shape = 'u8[8192]{0}', space=vmem, size = 0x2000, scoped, tag = 'output window, operand 0, single buffered']
    %9 = vsyncpa [#allocation3], 0
    %10 = vsyncpa [#allocation6], 0
    %11 = vsyncpa [#allocation9], 0
    %12 = vsyncpa [#allocation4], 0
    // Predicated region
    $region2: #{tpu_custom_call.1} parent=1 // pred_check
      _
    $region3: #{tpu_custom_call.1} parent=1 // pred_check_branch
      %14 = sbr.rel (0) target = $region5
    $region4: #{tpu_custom_call.1} parent=1 // pred_region
      %s16 = ssub.s32 128, 128
      %17 = vsyncadd [#allocation3], %s16
      %s18 = sshll.u32 [#allocation2], 4
      %s19 = int_to_ptr.vmem [resolvable:$true] %s18
      %24 = dma.hbm_to_vmem [thread:$0]  %s0, 128, %s19, [#allocation3], 64, 64, 4
    $region5: #{tpu_custom_call.1} parent=1 // pred_fallthru
      _
    // Predicated region
    $region6: #{tpu_custom_call.1} parent=1 // pred_check
      _
    $region7: #{tpu_custom_call.1} parent=1 // pred_check_branch
      %26 = sbr.rel (0) target = $region9
    $region8: #{tpu_custom_call.1} parent=1 // pred_region
      %s28 = ssub.s32 7168, 7168
      %29 = vsyncadd [#allocation6], %s28
      %s30 = sshll.u32 [#allocation5], 4
      %s31 = int_to_ptr.vmem [resolvable:$true] %s30
      %36 = dma.hbm_to_vmem [thread:$0]  %s1, 7168, %s31, [#allocation6], 448, 448, 28
    $region9: #{tpu_custom_call.1} parent=1 // pred_fallthru
      _
    // Predicated region
    $region10: #{tpu_custom_call.1} parent=1 // pred_check
      _
    $region11: #{tpu_custom_call.1} parent=1 // pred_check_branch
      %38 = sbr.rel (0) target = $region13
    $region12: #{tpu_custom_call.1} parent=1 // pred_region
      %s40 = ssub.s32 2048, 2048
      %41 = vsyncadd [#allocation6], %s40
      %s42 = sshll.u32 [#allocation7], 4
      %s43 = int_to_ptr.vmem [resolvable:$true] %s42
      %48 = dma.hbm_to_vmem [thread:$0]  %s2, 2048, %s43, [#allocation6], 64, 64, 4
    $region13: #{tpu_custom_call.1} parent=1 // pred_fallthru
      _
    // Predicated region
    $region14: #{tpu_custom_call.1} parent=1 // pred_check
      _
    $region15: #{tpu_custom_call.1} parent=1 // pred_check_branch
      %50 = sbr.rel (0) target = $region17
    $region16: #{tpu_custom_call.1} parent=1 // pred_region
      %s52 = ssub.s32 1024, 1024
      %53 = vsyncadd [#allocation9], %s52
      %s54 = sshll.u32 [#allocation8], 4
      %s55 = int_to_ptr.vmem [resolvable:$true] %s54
      %60 = dma.hbm_to_vmem [thread:$0]  %s3, 1024, %s55, [#allocation9], 512, 512, 32
    $region17: #{tpu_custom_call.1} parent=1 // pred_fallthru
      _
    // Predicated region
    $region18: #{tpu_custom_call.1} parent=1 // pred_check
      _
    $region19: #{tpu_custom_call.1} parent=1 // pred_check_branch
      %62 = sbr.rel (0) target = $region21
    $region20: #{tpu_custom_call.1} parent=1 // pred_region
      %63 = dma.done [#allocation3], 128
    $region21: #{tpu_custom_call.1} parent=1 // pred_fallthru
      _
    // Predicated region
    $region22: #{tpu_custom_call.1} parent=1 // pred_check
      _
    $region23: #{tpu_custom_call.1} parent=1 // pred_check_branch
      %65 = sbr.rel (0) target = $region25
    $region24: #{tpu_custom_call.1} parent=1 // pred_region
      %66 = dma.done [#allocation6], 7168
    $region25: #{tpu_custom_call.1} parent=1 // pred_fallthru
      _
    // Predicated region
    $region26: #{tpu_custom_call.1} parent=1 // pred_check
      _
    $region27: #{tpu_custom_call.1} parent=1 // pred_check_branch
      %68 = sbr.rel (0) target = $region29
    $region28: #{tpu_custom_call.1} parent=1 // pred_region
      %69 = dma.done [#allocation6], 2048
    $region29: #{tpu_custom_call.1} parent=1 // pred_fallthru
      _
    // Predicated region
    $region30: #{tpu_custom_call.1} parent=1 // pred_check
      _
    $region31: #{tpu_custom_call.1} parent=1 // pred_check_branch
      %71 = sbr.rel (0) target = $region33
    $region32: #{tpu_custom_call.1} parent=1 // pred_region
      %72 = dma.done [#allocation9], 1024
    $region33: #{tpu_custom_call.1} parent=1 // pred_fallthru
      _
    %v74 = vld [vmem:[#allocation2] sm:$0xf]
    %v75 = vld [vmem:[#allocation2 + $0x4] sm:$0xf]
    %v76 = vld [vmem:[#allocation5] sm:$0xff]
    %v77 = vld [vmem:[#allocation5 + $0x8] sm:$0xff]
    %v78 = vld [vmem:[#allocation5 + $0x10] sm:$0xff]
    %v79 = vld [vmem:[#allocation5 + $0x18] sm:$0xf]
    %v80 = vld [vmem:[#allocation5 + $0x1c] sm:$0xff]
    %v81 = vld [vmem:[#allocation5 + $0x24] sm:$0xff]
    %v82 = vld [vmem:[#allocation5 + $0x2c] sm:$0xff]
    %v83 = vld [vmem:[#allocation5 + $0x34] sm:$0xf]
    %v84 = vld [vmem:[#allocation5 + $0x38] sm:$0xff]
    %v85 = vld [vmem:[#allocation5 + $0x40] sm:$0xff]
    %v86 = vld [vmem:[#allocation5 + $0x48] sm:$0xff]
    %v87 = vld [vmem:[#allocation5 + $0x50] sm:$0xf]
    %v88 = vld [vmem:[#allocation5 + $0x54] sm:$0xff]
    %v89 = vld [vmem:[#allocation5 + $0x5c] sm:$0xff]
    %v90 = vld [vmem:[#allocation5 + $0x64] sm:$0xff]
    %v91 = vld [vmem:[#allocation5 + $0x6c] sm:$0xf]
    %v92 = vld [vmem:[#allocation5 + $0x70] sm:$0xff]
    %v93 = vld [vmem:[#allocation5 + $0x78] sm:$0xff]
    %v94 = vld [vmem:[#allocation5 + $0x80] sm:$0xff]
    %v95 = vld [vmem:[#allocation5 + $0x88] sm:$0xf]
    %v96 = vld [vmem:[#allocation5 + $0x8c] sm:$0xff]
    %v97 = vld [vmem:[#allocation5 + $0x94] sm:$0xff]
    %v98 = vld [vmem:[#allocation5 + $0x9c] sm:$0xff]
    %v99 = vld [vmem:[#allocation5 + $0xa4] sm:$0xf]
    %v100 = vld [vmem:[#allocation5 + $0xa8] sm:$0xff]
    %v101 = vld [vmem:[#allocation5 + $0xb0] sm:$0xff]
    %v102 = vld [vmem:[#allocation5 + $0xb8] sm:$0xff]
    %v103 = vld [vmem:[#allocation5 + $0xc0] sm:$0xf]
    %v104 = vld [vmem:[#allocation5 + $0xc4] sm:$0xff]
    %v105 = vld [vmem:[#allocation5 + $0xcc] sm:$0xff]
    %v106 = vld [vmem:[#allocation5 + $0xd4] sm:$0xff]
    %v107 = vld [vmem:[#allocation5 + $0xdc] sm:$0xf]
    %v108 = vld [vmem:[#allocation5 + $0xe0] sm:$0xff]
    %v109 = vld [vmem:[#allocation5 + $0xe8] sm:$0xff]
    %v110 = vld [vmem:[#allocation5 + $0xf0] sm:$0xff]
    %v111 = vld [vmem:[#allocation5 + $0xf8] sm:$0xf]
    %v112 = vld [vmem:[#allocation5 + $0xfc] sm:$0xff]
    %v113 = vld [vmem:[#allocation5 + $0x104] sm:$0xff]
    %v114 = vld [vmem:[#allocation5 + $0x10c] sm:$0xff]
    %v115 = vld [vmem:[#allocation5 + $0x114] sm:$0xf]
    %v116 = vld [vmem:[#allocation5 + $0x118] sm:$0xff]
    %v117 = vld [vmem:[#allocation5 + $0x120] sm:$0xff]
    %v118 = vld [vmem:[#allocation5 + $0x128] sm:$0xff]
    %v119 = vld [vmem:[#allocation5 + $0x130] sm:$0xf]
    %v120 = vld [vmem:[#allocation5 + $0x134] sm:$0xff]
    %v121 = vld [vmem:[#allocation5 + $0x13c] sm:$0xff]
    %v122 = vld [vmem:[#allocation5 + $0x144] sm:$0xff]
    %v123 = vld [vmem:[#allocation5 + $0x14c] sm:$0xf]
    %v124 = vld [vmem:[#allocation5 + $0x150] sm:$0xff]
    %v125 = vld [vmem:[#allocation5 + $0x158] sm:$0xff]
    %v126 = vld [vmem:[#allocation5 + $0x160] sm:$0xff]
    %v127 = vld [vmem:[#allocation5 + $0x168] sm:$0xf]
    %v128 = vld [vmem:[#allocation5 + $0x16c] sm:$0xff]
    %v129 = vld [vmem:[#allocation5 + $0x174] sm:$0xff]
    %v130 = vld [vmem:[#allocation5 + $0x17c] sm:$0xff]
    %v131 = vld [vmem:[#allocation5 + $0x184] sm:$0xf]
    %v132 = vld [vmem:[#allocation5 + $0x188] sm:$0xff]
    %v133 = vld [vmem:[#allocation5 + $0x190] sm:$0xff]
    %v134 = vld [vmem:[#allocation5 + $0x198] sm:$0xff]
    %v135 = vld [vmem:[#allocation5 + $0x1a0] sm:$0xf]
    %v136 = vld [vmem:[#allocation5 + $0x1a4] sm:$0xff]
    %v137 = vld [vmem:[#allocation5 + $0x1ac] sm:$0xff]
    %v138 = vld [vmem:[#allocation5 + $0x1b4] sm:$0xff]
    %v139 = vld [vmem:[#allocation5 + $0x1bc] sm:$0xf]
    %v142 = vunpack.c.l.b16 %v74
    %v143 = vunpack.c.l.b16 %v75
    %v144 = vpack.c.b16 %v143, %v142
    %v210 = vunpack.c.l.b16 %v76
    %v211 = vunpack.c.h.b16 %v76
    %v212 = vunpack.c.l.b16 %v77
    %v213 = vunpack.c.h.b16 %v77
    %v214 = vunpack.c.l.b16 %v78
    %v215 = vunpack.c.h.b16 %v78
    %v216 = vunpack.c.l.b16 %v79
    %v217 = vunpack.c.l.b16 %v80
    %v218 = vunpack.c.h.b16 %v80
    %v219 = vunpack.c.l.b16 %v81
    %v220 = vunpack.c.h.b16 %v81
    %v221 = vunpack.c.l.b16 %v82
    %v222 = vunpack.c.h.b16 %v82
    %v223 = vunpack.c.l.b16 %v83
    %v224 = vunpack.c.l.b16 %v84
    %v225 = vunpack.c.h.b16 %v84
    %v226 = vunpack.c.l.b16 %v85
    %v227 = vunpack.c.h.b16 %v85
    %v228 = vunpack.c.l.b16 %v86
    %v229 = vunpack.c.h.b16 %v86
    %v230 = vunpack.c.l.b16 %v87
    %v231 = vunpack.c.l.b16 %v88
    %v232 = vunpack.c.h.b16 %v88
    %v233 = vunpack.c.l.b16 %v89
    %v234 = vunpack.c.h.b16 %v89
    %v235 = vunpack.c.l.b16 %v90
    %v236 = vunpack.c.h.b16 %v90
    %v237 = vunpack.c.l.b16 %v91
    %v238 = vunpack.c.l.b16 %v92
    %v239 = vunpack.c.h.b16 %v92
    %v240 = vunpack.c.l.b16 %v93
    %v241 = vunpack.c.h.b16 %v93
    %v242 = vunpack.c.l.b16 %v94
    %v243 = vunpack.c.h.b16 %v94
    %v244 = vunpack.c.l.b16 %v95
    %v245 = vunpack.c.l.b16 %v96
    %v246 = vunpack.c.h.b16 %v96
    %v247 = vunpack.c.l.b16 %v97
    %v248 = vunpack.c.h.b16 %v97
    %v249 = vunpack.c.l.b16 %v98
    %v250 = vunpack.c.h.b16 %v98
    %v251 = vunpack.c.l.b16 %v99
    %v252 = vunpack.c.l.b16 %v100
    %v253 = vunpack.c.h.b16 %v100
    %v254 = vunpack.c.l.b16 %v101
    %v255 = vunpack.c.h.b16 %v101
    %v256 = vunpack.c.l.b16 %v102
    %v257 = vunpack.c.h.b16 %v102
    %v258 = vunpack.c.l.b16 %v103
    %v259 = vunpack.c.l.b16 %v104
    %v260 = vunpack.c.h.b16 %v104
    %v261 = vunpack.c.l.b16 %v105
    %v262 = vunpack.c.h.b16 %v105
    %v263 = vunpack.c.l.b16 %v106
    %v264 = vunpack.c.h.b16 %v106
    %v265 = vunpack.c.l.b16 %v107
    %v266 = vunpack.c.l.b16 %v108
    %v267 = vunpack.c.h.b16 %v108
    %v268 = vunpack.c.l.b16 %v109
    %v269 = vunpack.c.h.b16 %v109
    %v270 = vunpack.c.l.b16 %v110
    %v271 = vunpack.c.h.b16 %v110
    %v272 = vunpack.c.l.b16 %v111
    %v273 = vunpack.c.l.b16 %v112
    %v274 = vunpack.c.h.b16 %v112
    %v275 = vunpack.c.l.b16 %v113
    %v276 = vunpack.c.h.b16 %v113
    %v277 = vunpack.c.l.b16 %v114
    %v278 = vunpack.c.h.b16 %v114
    %v279 = vunpack.c.l.b16 %v115
    %v280 = vunpack.c.l.b16 %v116
    %v281 = vunpack.c.h.b16 %v116
    %v282 = vunpack.c.l.b16 %v117
    %v283 = vunpack.c.h.b16 %v117
    %v284 = vunpack.c.l.b16 %v118
    %v285 = vunpack.c.h.b16 %v118
    %v286 = vunpack.c.l.b16 %v119
    %v287 = vunpack.c.l.b16 %v120
    %v288 = vunpack.c.h.b16 %v120
    %v289 = vunpack.c.l.b16 %v121
    %v290 = vunpack.c.h.b16 %v121
    %v291 = vunpack.c.l.b16 %v122
    %v292 = vunpack.c.h.b16 %v122
    %v293 = vunpack.c.l.b16 %v123
    %v294 = vunpack.c.l.b16 %v124
    %v295 = vunpack.c.h.b16 %v124
    %v296 = vunpack.c.l.b16 %v125
    %v297 = vunpack.c.h.b16 %v125
    %v298 = vunpack.c.l.b16 %v126
    %v299 = vunpack.c.h.b16 %v126
    %v300 = vunpack.c.l.b16 %v127
    %v301 = vunpack.c.l.b16 %v128
    %v302 = vunpack.c.h.b16 %v128
    %v303 = vunpack.c.l.b16 %v129
    %v304 = vunpack.c.h.b16 %v129
    %v305 = vunpack.c.l.b16 %v130
    %v306 = vunpack.c.h.b16 %v130
    %v307 = vunpack.c.l.b16 %v131
    %v308 = vunpack.c.l.b16 %v132
    %v309 = vunpack.c.h.b16 %v132
    %v310 = vunpack.c.l.b16 %v133
    %v311 = vunpack.c.h.b16 %v133
    %v312 = vunpack.c.l.b16 %v134
    %v313 = vunpack.c.h.b16 %v134
    %v314 = vunpack.c.l.b16 %v135
    %v315 = vunpack.c.l.b16 %v136
    %v316 = vunpack.c.h.b16 %v136
    %v317 = vunpack.c.l.b16 %v137
    %v318 = vunpack.c.h.b16 %v137
    %v319 = vunpack.c.l.b16 %v138
    %v320 = vunpack.c.h.b16 %v138
    %v321 = vunpack.c.l.b16 %v139
    %v322 = vpack.c.b16 %v217, %v210
    %v323 = vpack.c.b16 %v218, %v211
    %v324 = vpack.c.b16 %v219, %v212
    %v325 = vpack.c.b16 %v220, %v213
    %v326 = vpack.c.b16 %v221, %v214
    %v327 = vpack.c.b16 %v222, %v215
    %v328 = vpack.c.b16 %v223, %v216
    %v329 = vpack.c.b16 %v231, %v224
    %v330 = vpack.c.b16 %v232, %v225
    %v331 = vpack.c.b16 %v233, %v226
    %v332 = vpack.c.b16 %v234, %v227
    %v333 = vpack.c.b16 %v235, %v228
    %v334 = vpack.c.b16 %v236, %v229
    %v335 = vpack.c.b16 %v237, %v230
    %v336 = vpack.c.b16 %v245, %v238
    %v337 = vpack.c.b16 %v246, %v239
    %v338 = vpack.c.b16 %v247, %v240
    %v339 = vpack.c.b16 %v248, %v241
    %v340 = vpack.c.b16 %v249, %v242
    %v341 = vpack.c.b16 %v250, %v243
    %v342 = vpack.c.b16 %v251, %v244
    %v343 = vpack.c.b16 %v259, %v252
    %v344 = vpack.c.b16 %v260, %v253
    %v345 = vpack.c.b16 %v261, %v254
    %v346 = vpack.c.b16 %v262, %v255
    %v347 = vpack.c.b16 %v263, %v256
    %v348 = vpack.c.b16 %v264, %v257
    %v349 = vpack.c.b16 %v265, %v258
    %v350 = vpack.c.b16 %v273, %v266
    %v351 = vpack.c.b16 %v274, %v267
    %v352 = vpack.c.b16 %v275, %v268
    %v353 = vpack.c.b16 %v276, %v269
    %v354 = vpack.c.b16 %v277, %v270
    %v355 = vpack.c.b16 %v278, %v271
    %v356 = vpack.c.b16 %v279, %v272
    %v357 = vpack.c.b16 %v287, %v280
    %v358 = vpack.c.b16 %v288, %v281
    %v359 = vpack.c.b16 %v289, %v282
    %v360 = vpack.c.b16 %v290, %v283
    %v361 = vpack.c.b16 %v291, %v284
    %v362 = vpack.c.b16 %v292, %v285
    %v363 = vpack.c.b16 %v293, %v286
    %v364 = vpack.c.b16 %v301, %v294
    %v365 = vpack.c.b16 %v302, %v295
    %v366 = vpack.c.b16 %v303, %v296
    %v367 = vpack.c.b16 %v304, %v297
    %v368 = vpack.c.b16 %v305, %v298
    %v369 = vpack.c.b16 %v306, %v299
    %v370 = vpack.c.b16 %v307, %v300
    %v371 = vpack.c.b16 %v315, %v308
    %v372 = vpack.c.b16 %v316, %v309
    %v373 = vpack.c.b16 %v317, %v310
    %v374 = vpack.c.b16 %v318, %v311
    %v375 = vpack.c.b16 %v319, %v312
    %v376 = vpack.c.b16 %v320, %v313
    %v377 = vpack.c.b16 %v321, %v314
    %434 = vmatprep.subr.bf16.mxu0 %v323
    %435 = vmatpush1.bf16.msra.mxu0 %v322
    %436 = vmatprep.subr.bf16.mxu0 %v330
    %437 = vmatpush1.bf16.msra.mxu0 %v329
    %438 = vmatprep.subr.bf16.mxu0 %v337
    %439 = vmatpush1.bf16.msra.mxu0 %v336
    %440 = vmatprep.subr.bf16.mxu0 %v344
    %441 = vmatpush1.bf16.msra.mxu0 %v343
    %442 = vmatprep.subr.bf16.mxu0 %v351
    %443 = vmatpush1.bf16.msra.mxu0 %v350
    %444 = vmatprep.subr.bf16.mxu0 %v358
    %445 = vmatpush1.bf16.msra.mxu0 %v357
    %446 = vmatprep.subr.bf16.mxu0 %v365
    %447 = vmatpush1.bf16.msra.mxu0 %v364
    %448 = vmatprep.subr.bf16.mxu0 %v372
    %449 = vmatpush1.bf16.msra.mxu0 %v371
    %450 = vmatprep.subr.bf16.mxu0 0
    %451 = vmatpush1.bf16.msra.mxu0 0
    %452 = vmatprep.subr.bf16.mxu0 0
    %453 = vmatpush1.bf16.msra.mxu0 0
    %454 = vmatprep.subr.bf16.mxu0 0
    %455 = vmatpush1.bf16.msra.mxu0 0
    %456 = vmatprep.subr.bf16.mxu0 0
    %457 = vmatpush1.bf16.msra.mxu0 0
    %458 = vmatprep.subr.bf16.mxu0 0
    %459 = vmatpush1.bf16.msra.mxu0 0
    %460 = vmatprep.subr.bf16.mxu0 0
    %461 = vmatpush1.bf16.msra.mxu0 0
    %462 = vmatprep.subr.bf16.mxu0 0
    %463 = vmatpush1.bf16.msra.mxu0 0
    %464 = vmatprep.subr.bf16.mxu0 0
    %465 = vmatpush1.bf16.msra.mxu0 0
    %466 = vmatprep.mubr.bf16.mxu0 0
    %467 = vmatmul.mubr.bf16.gmra.mrb[0].mxu0 %v144
    %v468 = vpop.f32.mrb[0].mxu0
    %v469 = vadd.f32 0.0, %v468
    %v470 = vpop.f32.mrb[0].mxu0
    %v471 = vadd.f32 0.0, %v470
    %v472 = vpop.f32.mrb[0].mxu0
    %v473 = vadd.f32 0.0, %v472
    %v474 = vpop.f32.mrb[0].mxu0
    %v475 = vadd.f32 0.0, %v474
    %476 = vdwg.mxu0
    %477 = vmatprep.subr.bf16.mxu0 %v325
    %478 = vmatpush1.bf16.msra.mxu0 %v324
    %479 = vmatprep.subr.bf16.mxu0 %v332
    %480 = vmatpush1.bf16.msra.mxu0 %v331
    %481 = vmatprep.subr.bf16.mxu0 %v339
    %482 = vmatpush1.bf16.msra.mxu0 %v338
    %483 = vmatprep.subr.bf16.mxu0 %v346
    %484 = vmatpush1.bf16.msra.mxu0 %v345
    %485 = vmatprep.subr.bf16.mxu0 %v353
    %486 = vmatpush1.bf16.msra.mxu0 %v352
    %487 = vmatprep.subr.bf16.mxu0 %v360
    %488 = vmatpush1.bf16.msra.mxu0 %v359
    %489 = vmatprep.subr.bf16.mxu0 %v367
    %490 = vmatpush1.bf16.msra.mxu0 %v366
    %491 = vmatprep.subr.bf16.mxu0 %v374
    %492 = vmatpush1.bf16.msra.mxu0 %v373
    %493 = vmatprep.subr.bf16.mxu0 0
    %494 = vmatpush1.bf16.msra.mxu0 0
    %495 = vmatprep.subr.bf16.mxu0 0
    %496 = vmatpush1.bf16.msra.mxu0 0
    %497 = vmatprep.subr.bf16.mxu0 0
    %498 = vmatpush1.bf16.msra.mxu0 0
    %499 = vmatprep.subr.bf16.mxu0 0
    %500 = vmatpush1.bf16.msra.mxu0 0
    %501 = vmatprep.subr.bf16.mxu0 0
    %502 = vmatpush1.bf16.msra.mxu0 0
    %503 = vmatprep.subr.bf16.mxu0 0
    %504 = vmatpush1.bf16.msra.mxu0 0
    %505 = vmatprep.subr.bf16.mxu0 0
    %506 = vmatpush1.bf16.msra.mxu0 0
    %507 = vmatprep.subr.bf16.mxu0 0
    %508 = vmatpush1.bf16.msra.mxu0 0
    %509 = vmatprep.mubr.bf16.mxu0 0
    %510 = vmatmul.mubr.bf16.gmra.mrb[0].mxu0 %v144
    %v511 = vpop.f32.mrb[0].mxu0
    %v512 = vadd.f32 0.0, %v511
    %v513 = vpop.f32.mrb[0].mxu0
    %v514 = vadd.f32 0.0, %v513
    %v515 = vpop.f32.mrb[0].mxu0
    %v516 = vadd.f32 0.0, %v515
    %v517 = vpop.f32.mrb[0].mxu0
    %v518 = vadd.f32 0.0, %v517
    %519 = vdwg.mxu0
    %520 = vmatprep.subr.bf16.mxu0 %v327
    %521 = vmatpush1.bf16.msra.mxu0 %v326
    %522 = vmatprep.subr.bf16.mxu0 %v334
    %523 = vmatpush1.bf16.msra.mxu0 %v333
    %524 = vmatprep.subr.bf16.mxu0 %v341
    %525 = vmatpush1.bf16.msra.mxu0 %v340
    %526 = vmatprep.subr.bf16.mxu0 %v348
    %527 = vmatpush1.bf16.msra.mxu0 %v347
    %528 = vmatprep.subr.bf16.mxu0 %v355
    %529 = vmatpush1.bf16.msra.mxu0 %v354
    %530 = vmatprep.subr.bf16.mxu0 %v362
    %531 = vmatpush1.bf16.msra.mxu0 %v361
    %532 = vmatprep.subr.bf16.mxu0 %v369
    %533 = vmatpush1.bf16.msra.mxu0 %v368
    %534 = vmatprep.subr.bf16.mxu0 %v376
    %535 = vmatpush1.bf16.msra.mxu0 %v375
    %536 = vmatprep.subr.bf16.mxu0 0
    %537 = vmatpush1.bf16.msra.mxu0 0
    %538 = vmatprep.subr.bf16.mxu0 0
    %539 = vmatpush1.bf16.msra.mxu0 0
    %540 = vmatprep.subr.bf16.mxu0 0
    %541 = vmatpush1.bf16.msra.mxu0 0
    %542 = vmatprep.subr.bf16.mxu0 0
    %543 = vmatpush1.bf16.msra.mxu0 0
    %544 = vmatprep.subr.bf16.mxu0 0
    %545 = vmatpush1.bf16.msra.mxu0 0
    %546 = vmatprep.subr.bf16.mxu0 0
    %547 = vmatpush1.bf16.msra.mxu0 0
    %548 = vmatprep.subr.bf16.mxu0 0
    %549 = vmatpush1.bf16.msra.mxu0 0
    %550 = vmatprep.subr.bf16.mxu0 0
    %551 = vmatpush1.bf16.msra.mxu0 0
    %552 = vmatprep.mubr.bf16.mxu0 0
    %553 = vmatmul.mubr.bf16.gmra.mrb[0].mxu0 %v144
    %v554 = vpop.f32.mrb[0].mxu0
    %v555 = vadd.f32 0.0, %v554
    %v556 = vpop.f32.mrb[0].mxu0
    %v557 = vadd.f32 0.0, %v556
    %v558 = vpop.f32.mrb[0].mxu0
    %v559 = vadd.f32 0.0, %v558
    %v560 = vpop.f32.mrb[0].mxu0
    %v561 = vadd.f32 0.0, %v560
    %562 = vdwg.mxu0
    %563 = vmatprep.subr.bf16.mxu0 0
    %564 = vmatpush1.bf16.msra.mxu0 %v328
    %565 = vmatprep.subr.bf16.mxu0 0
    %566 = vmatpush1.bf16.msra.mxu0 %v335
    %567 = vmatprep.subr.bf16.mxu0 0
    %568 = vmatpush1.bf16.msra.mxu0 %v342
    %569 = vmatprep.subr.bf16.mxu0 0
    %570 = vmatpush1.bf16.msra.mxu0 %v349
    %571 = vmatprep.subr.bf16.mxu0 0
    %572 = vmatpush1.bf16.msra.mxu0 %v356
    %573 = vmatprep.subr.bf16.mxu0 0
    %574 = vmatpush1.bf16.msra.mxu0 %v363
    %575 = vmatprep.subr.bf16.mxu0 0
    %576 = vmatpush1.bf16.msra.mxu0 %v370
    %577 = vmatprep.subr.bf16.mxu0 0
    %578 = vmatpush1.bf16.msra.mxu0 %v377
    %579 = vmatprep.subr.bf16.mxu0 0
    %580 = vmatpush1.bf16.msra.mxu0 0
    %581 = vmatprep.subr.bf16.mxu0 0
    %582 = vmatpush1.bf16.msra.mxu0 0
    %583 = vmatprep.subr.bf16.mxu0 0
    %584 = vmatpush1.bf16.msra.mxu0 0
    %585 = vmatprep.subr.bf16.mxu0 0
    %586 = vmatpush1.bf16.msra.mxu0 0
    %587 = vmatprep.subr.bf16.mxu0 0
    %588 = vmatpush1.bf16.msra.mxu0 0
    %589 = vmatprep.subr.bf16.mxu0 0
    %590 = vmatpush1.bf16.msra.mxu0 0
    %591 = vmatprep.subr.bf16.mxu0 0
    %592 = vmatpush1.bf16.msra.mxu0 0
    %593 = vmatprep.subr.bf16.mxu0 0
    %594 = vmatpush1.bf16.msra.mxu0 0
    %595 = vmatprep.mubr.bf16.mxu0 0
    %596 = vmatmul.mubr.bf16.gmra.mrb[0].mxu0 %v144
    %v597 = vpop.f32.mrb[0].mxu0
    %v598 = vadd.f32 0.0, %v597
    %v599 = vpop.f32.mrb[0].mxu0
    %v600 = vpop.f32.mrb[0].mxu0
    %v601 = vadd.f32 0.0, %v600
    %v602 = vpop.f32.mrb[0].mxu0
    %603 = vdwg.mxu0
    %v604 = vld [vmem:[#allocation8] sm:$0xff]
    %v605 = vld [vmem:[#allocation8 + $0x8] sm:$0xff]
    %v606 = vld [vmem:[#allocation8 + $0x10] sm:$0xff]
    %v607 = vld [vmem:[#allocation8 + $0x18] sm:$0xff]
    %v608 = vld [vmem:[#allocation8 + $0x20] sm:$0xff]
    %v609 = vld [vmem:[#allocation8 + $0x28] sm:$0xff]
    %v610 = vld [vmem:[#allocation8 + $0x30] sm:$0xff]
    %v611 = vld [vmem:[#allocation8 + $0x38] sm:$0xff]
    %v612 = vmul.f32 %v469, %v604
    %v613 = vmul.f32 %v471, %v605
    %v614 = vmul.f32 %v473, %v608
    %v615 = vmul.f32 %v475, %v609
    %v616 = vmul.f32 %v512, %v606
    %v617 = vmul.f32 %v514, %v607
    %v618 = vmul.f32 %v516, %v610
    %v619 = vmul.f32 %v518, %v611
    %v620 = vadd.f32 %v612, %v616
    %v621 = vadd.f32 %v613, %v617
    %v622 = vadd.f32 %v614, %v618
    %v623 = vadd.f32 %v615, %v619
    %v624 = vmul.f32 %v555, %v604
    %v625 = vmul.f32 %v559, %v608
    %v626 = vmul.f32 %v557, %v606
    %v627 = vmul.f32 %v561, %v610
    %v628 = vadd.f32 %v624, %v626
    %v629 = vadd.f32 %v625, %v627
    %v630 = vlaneseq
    %v631 = vshrl.u32 %v630, 7
    %v632 = vadd.s32 %v631, 8
    %v633 = vlaneseq
    %v634 = vand.u32 %v633, 127
    %vm635 = vcmp.le.s32.totalorder %v634, %v631
    %vm636 = vcmp.le.s32.totalorder %v634, %v632
    %v637 = vsel %vm635, 0.0, -1e+30
    %v638 = vsel %vm636, 0.0, -1e+30
    %v639 = vpack.c.bf16 %v622, %v620
    %v640 = vpack.c.bf16 %v623, %v621
    %v641 = vpack.c.bf16 %v629, %v628
    %v642 = vpack.c.bf16 %v601, %v598
    %v643 = vld [vmem:[#allocation7] sm:$0xf]
    %v644 = vld [vmem:[#allocation7 + $0x4] sm:$0xf]
    %v645 = vld [vmem:[#allocation7 + $0x8] sm:$0xf]
    %v646 = vld [vmem:[#allocation7 + $0xc] sm:$0xf]
    %v647 = vld [vmem:[#allocation7 + $0x10] sm:$0xf]
    %v648 = vld [vmem:[#allocation7 + $0x14] sm:$0xf]
    %v649 = vld [vmem:[#allocation7 + $0x18] sm:$0xf]
    %v650 = vld [vmem:[#allocation7 + $0x1c] sm:$0xf]
    %v651 = vld [vmem:[#allocation7 + $0x20] sm:$0xf]
    %v652 = vld [vmem:[#allocation7 + $0x24] sm:$0xf]
    %v653 = vld [vmem:[#allocation7 + $0x28] sm:$0xf]
    %v654 = vld [vmem:[#allocation7 + $0x2c] sm:$0xf]
    %v655 = vld [vmem:[#allocation7 + $0x30] sm:$0xf]
    %v656 = vld [vmem:[#allocation7 + $0x34] sm:$0xf]
    %v657 = vld [vmem:[#allocation7 + $0x38] sm:$0xf]
    %v658 = vld [vmem:[#allocation7 + $0x3c] sm:$0xf]
    %v659 = vld [vmem:[#allocation7 + $0x40] sm:$0xf]
    %v660 = vld [vmem:[#allocation7 + $0x44] sm:$0xf]
    %v661 = vld [vmem:[#allocation7 + $0x48] sm:$0xf]
    %v662 = vld [vmem:[#allocation7 + $0x4c] sm:$0xf]
    %v663 = vld [vmem:[#allocation7 + $0x50] sm:$0xf]
    %v664 = vld [vmem:[#allocation7 + $0x54] sm:$0xf]
    %v665 = vld [vmem:[#allocation7 + $0x58] sm:$0xf]
    %v666 = vld [vmem:[#allocation7 + $0x5c] sm:$0xf]
    %v667 = vld [vmem:[#allocation7 + $0x60] sm:$0xf]
    %v668 = vld [vmem:[#allocation7 + $0x64] sm:$0xf]
    %v669 = vld [vmem:[#allocation7 + $0x68] sm:$0xf]
    %v670 = vld [vmem:[#allocation7 + $0x6c] sm:$0xf]
    %v671 = vld [vmem:[#allocation7 + $0x70] sm:$0xf]
    %v672 = vld [vmem:[#allocation7 + $0x74] sm:$0xf]
    %v673 = vld [vmem:[#allocation7 + $0x78] sm:$0xf]
    %v674 = vld [vmem:[#allocation7 + $0x7c] sm:$0xf]
    %vm675 = vcmask 523264
    %v677 = vsel %vm675, %v639, 0
    %v680 = vsel %vm675, %v641, 0
    %682 = vmatprep.subr.bf16.mxu0 0
    %683 = vmatpush1.bf16.xpose.msra.mxu0 %v680
    %684 = vmatprep.subr.bf16.mxu0 0
    %685 = vmatpush1.bf16.xpose.msra.mxu0 0
    %686 = vmatprep.subr.bf16.mxu0 0
    %687 = vmatpush1.bf16.xpose.msra.mxu0 0
    %688 = vmatprep.subr.bf16.mxu0 0
    %689 = vmatpush1.bf16.xpose.msra.mxu0 0
    %690 = vmatprep.subr.bf16.mxu0 0
    %691 = vmatpush1.bf16.xpose.msra.mxu0 0
    %692 = vmatprep.subr.bf16.mxu0 0
    %693 = vmatpush1.bf16.xpose.msra.mxu0 0
    %694 = vmatprep.subr.bf16.mxu0 0
    %695 = vmatpush1.bf16.xpose.msra.mxu0 0
    %696 = vmatprep.subr.bf16.mxu0 0
    %697 = vmatpush1.bf16.xpose.msra.mxu0 0
    %698 = vmatprep.subr.bf16.mxu0 0
    %699 = vmatpush1.bf16.xpose.msra.mxu0 0
    %700 = vmatprep.subr.bf16.mxu0 0
    %701 = vmatpush1.bf16.xpose.msra.mxu0 0
    %702 = vmatprep.subr.bf16.mxu0 0
    %703 = vmatpush1.bf16.xpose.msra.mxu0 0
    %704 = vmatprep.subr.bf16.mxu0 0
    %705 = vmatpush1.bf16.xpose.msra.mxu0 0
    %706 = vmatprep.subr.bf16.mxu0 0
    %707 = vmatpush1.bf16.xpose.msra.mxu0 0
    %708 = vmatprep.subr.bf16.mxu0 0
    %709 = vmatpush1.bf16.xpose.msra.mxu0 0
    %710 = vmatprep.subr.bf16.mxu0 0
    %711 = vmatpush1.bf16.xpose.msra.mxu0 0
    %712 = vmatprep.subr.bf16.mxu0 0
    %713 = vmatpush1.bf16.xpose.msra.mxu0 0
    %714 = vmatprep.mubr.bf16.mxu0 0
    %715 = vmatmul.mubr.bf16.gmra.mrb[0].mxu0 %v677
    %v716 = vpop.f32.mrb[0].mxu0
    %v717 = vadd.f32 %v637, %v716
    %v718 = vpop.f32.mrb[0].mxu0
    %v719 = vpop.f32.mrb[0].mxu0
    %v720 = vadd.f32 %v638, %v719
    %v721 = vpop.f32.mrb[0].mxu0
    %722 = vdwg.mxu0
    %vm723 = vcmask 130048
    %v724 = vsel %vm723, %v717, -inf
    %725 = vmax.xlane.f32.xlu0 %v724
    %v726 = vpop.xlane.xlu0 %725
    %v727 = vsel %vm723, %v720, -inf
    %728 = vmax.xlane.f32.xlu0 %v727
    %v729 = vpop.xlane.xlu0 %728
    %v730 = vsub.f32 %v717, %v726
    %v731 = vsub.f32 %v720, %v729
    %v732 = vmul.f32 %v730, 1.442695
    %v733 = vpow.pop %v732
    %v734 = vmul.f32 %v731, 1.442695
    %v735 = vpow.pop %v734
    %v736 = vsel %vm723, %v733, 0.0
    %737 = vadd.xlane.f32.xlu0 %v736
    %v738 = vpop.xlane.xlu0 %737
    %v739 = vsel %vm723, %v735, 0.0
    %740 = vadd.xlane.f32.xlu0 %v739
    %v741 = vpop.xlane.xlu0 %740
    %v742 = vpack.c.bf16 %v735, %v733
    %v744 = vsel %vm723, %v742, 0
    %746 = vmatprep.subr.bf16.mxu0 0
    %747 = vmatpush1.bf16.msra.mxu0 %v642
    %748 = vmatprep.subr.bf16.mxu0 0
    %749 = vmatpush1.bf16.msra.mxu0 0
    %750 = vmatprep.subr.bf16.mxu0 0
    %751 = vmatpush1.bf16.msra.mxu0 0
    %752 = vmatprep.subr.bf16.mxu0 0
    %753 = vmatpush1.bf16.msra.mxu0 0
    %754 = vmatprep.subr.bf16.mxu0 0
    %755 = vmatpush1.bf16.msra.mxu0 0
    %756 = vmatprep.subr.bf16.mxu0 0
    %757 = vmatpush1.bf16.msra.mxu0 0
    %758 = vmatprep.subr.bf16.mxu0 0
    %759 = vmatpush1.bf16.msra.mxu0 0
    %760 = vmatprep.subr.bf16.mxu0 0
    %761 = vmatpush1.bf16.msra.mxu0 0
    %762 = vmatprep.subr.bf16.mxu0 0
    %763 = vmatpush1.bf16.msra.mxu0 0
    %764 = vmatprep.subr.bf16.mxu0 0
    %765 = vmatpush1.bf16.msra.mxu0 0
    %766 = vmatprep.subr.bf16.mxu0 0
    %767 = vmatpush1.bf16.msra.mxu0 0
    %768 = vmatprep.subr.bf16.mxu0 0
    %769 = vmatpush1.bf16.msra.mxu0 0
    %770 = vmatprep.subr.bf16.mxu0 0
    %771 = vmatpush1.bf16.msra.mxu0 0
    %772 = vmatprep.subr.bf16.mxu0 0
    %773 = vmatpush1.bf16.msra.mxu0 0
    %774 = vmatprep.subr.bf16.mxu0 0
    %775 = vmatpush1.bf16.msra.mxu0 0
    %776 = vmatprep.subr.bf16.mxu0 0
    %777 = vmatpush1.bf16.msra.mxu0 0
    %778 = vmatprep.mubr.bf16.mxu0 0
    %779 = vmatmul.mubr.bf16.gmra.mrb[0].mxu0 %v744
    %v780 = vpop.f32.mrb[0].mxu0
    %v781 = vadd.f32 0.0, %v780
    %v782 = vpop.f32.mrb[0].mxu0
    %v783 = vpop.f32.mrb[0].mxu0
    %v784 = vadd.f32 0.0, %v783
    %v785 = vpop.f32.mrb[0].mxu0
    %786 = vdwg.mxu0
    %v787 = vrcp.pop %v738
    %v788 = vrcp.pop %v741
    %v789 = vmul.f32 %v781, %v787
    %v790 = vmul.f32 %v784, %v788
    %v791 = vpack.c.bf16 %v790, %v789
    %793 = vrot.lane.b32.xlu0 %v639, 64
    %v794 = vpop.permute.xlu0 %793
    %v796 = vsel %vm675, %v794, 0
    %798 = vmatprep.subr.bf16.mxu0 0
    %799 = vmatpush1.bf16.xpose.msra.mxu0 %v680
    %800 = vmatprep.subr.bf16.mxu0 0
    %801 = vmatpush1.bf16.xpose.msra.mxu0 0
    %802 = vmatprep.subr.bf16.mxu0 0
    %803 = vmatpush1.bf16.xpose.msra.mxu0 0
    %804 = vmatprep.subr.bf16.mxu0 0
    %805 = vmatpush1.bf16.xpose.msra.mxu0 0
    %806 = vmatprep.subr.bf16.mxu0 0
    %807 = vmatpush1.bf16.xpose.msra.mxu0 0
    %808 = vmatprep.subr.bf16.mxu0 0
    %809 = vmatpush1.bf16.xpose.msra.mxu0 0
    %810 = vmatprep.subr.bf16.mxu0 0
    %811 = vmatpush1.bf16.xpose.msra.mxu0 0
    %812 = vmatprep.subr.bf16.mxu0 0
    %813 = vmatpush1.bf16.xpose.msra.mxu0 0
    %814 = vmatprep.subr.bf16.mxu0 0
    %815 = vmatpush1.bf16.xpose.msra.mxu0 0
    %816 = vmatprep.subr.bf16.mxu0 0
    %817 = vmatpush1.bf16.xpose.msra.mxu0 0
    %818 = vmatprep.subr.bf16.mxu0 0
    %819 = vmatpush1.bf16.xpose.msra.mxu0 0
    %820 = vmatprep.subr.bf16.mxu0 0
    %821 = vmatpush1.bf16.xpose.msra.mxu0 0
    %822 = vmatprep.subr.bf16.mxu0 0
    %823 = vmatpush1.bf16.xpose.msra.mxu0 0
    %824 = vmatprep.subr.bf16.mxu0 0
    %825 = vmatpush1.bf16.xpose.msra.mxu0 0
    %826 = vmatprep.subr.bf16.mxu0 0
    %827 = vmatpush1.bf16.xpose.msra.mxu0 0
    %828 = vmatprep.subr.bf16.mxu0 0
    %829 = vmatpush1.bf16.xpose.msra.mxu0 0
    %830 = vmatprep.mubr.bf16.mxu0 0
    %831 = vmatmul.mubr.bf16.gmra.mrb[0].mxu0 %v796
    %v832 = vpop.f32.mrb[0].mxu0
    %v833 = vadd.f32 %v637, %v832
    %v834 = vpop.f32.mrb[0].mxu0
    %v835 = vpop.f32.mrb[0].mxu0
    %v836 = vadd.f32 %v638, %v835
    %v837 = vpop.f32.mrb[0].mxu0
    %838 = vdwg.mxu0
    %v839 = vsel %vm723, %v833, -inf
    %840 = vmax.xlane.f32.xlu0 %v839
    %v841 = vpop.xlane.xlu0 %840
    %v842 = vsel %vm723, %v836, -inf
    %843 = vmax.xlane.f32.xlu0 %v842
    %v844 = vpop.xlane.xlu0 %843
    %v845 = vsub.f32 %v833, %v841
    %v846 = vsub.f32 %v836, %v844
    %v847 = vmul.f32 %v845, 1.442695
    %v848 = vpow.pop %v847
    %v849 = vmul.f32 %v846, 1.442695
    %v850 = vpow.pop %v849
    %v851 = vsel %vm723, %v848, 0.0
    %852 = vadd.xlane.f32.xlu0 %v851
    %v853 = vpop.xlane.xlu0 %852
    %v854 = vsel %vm723, %v850, 0.0
    %855 = vadd.xlane.f32.xlu0 %v854
    %v856 = vpop.xlane.xlu0 %855
    %v857 = vpack.c.bf16 %v850, %v848
    %v859 = vsel %vm723, %v857, 0
    %861 = vmatprep.subr.bf16.mxu0 0
    %862 = vmatpush1.bf16.msra.mxu0 %v642
    %863 = vmatprep.subr.bf16.mxu0 0
    %864 = vmatpush1.bf16.msra.mxu0 0
    %865 = vmatprep.subr.bf16.mxu0 0
    %866 = vmatpush1.bf16.msra.mxu0 0
    %867 = vmatprep.subr.bf16.mxu0 0
    %868 = vmatpush1.bf16.msra.mxu0 0
    %869 = vmatprep.subr.bf16.mxu0 0
    %870 = vmatpush1.bf16.msra.mxu0 0
    %871 = vmatprep.subr.bf16.mxu0 0
    %872 = vmatpush1.bf16.msra.mxu0 0
    %873 = vmatprep.subr.bf16.mxu0 0
    %874 = vmatpush1.bf16.msra.mxu0 0
    %875 = vmatprep.subr.bf16.mxu0 0
    %876 = vmatpush1.bf16.msra.mxu0 0
    %877 = vmatprep.subr.bf16.mxu0 0
    %878 = vmatpush1.bf16.msra.mxu0 0
    %879 = vmatprep.subr.bf16.mxu0 0
    %880 = vmatpush1.bf16.msra.mxu0 0
    %881 = vmatprep.subr.bf16.mxu0 0
    %882 = vmatpush1.bf16.msra.mxu0 0
    %883 = vmatprep.subr.bf16.mxu0 0
    %884 = vmatpush1.bf16.msra.mxu0 0
    %885 = vmatprep.subr.bf16.mxu0 0
    %886 = vmatpush1.bf16.msra.mxu0 0
    %887 = vmatprep.subr.bf16.mxu0 0
    %888 = vmatpush1.bf16.msra.mxu0 0
    %889 = vmatprep.subr.bf16.mxu0 0
    %890 = vmatpush1.bf16.msra.mxu0 0
    %891 = vmatprep.subr.bf16.mxu0 0
    %892 = vmatpush1.bf16.msra.mxu0 0
    %893 = vmatprep.mubr.bf16.mxu0 0
    %894 = vmatmul.mubr.bf16.gmra.mrb[0].mxu0 %v859
    %v895 = vpop.f32.mrb[0].mxu0
    %v896 = vadd.f32 0.0, %v895
    %v897 = vpop.f32.mrb[0].mxu0
    %v898 = vpop.f32.mrb[0].mxu0
    %v899 = vadd.f32 0.0, %v898
    %v900 = vpop.f32.mrb[0].mxu0
    %901 = vdwg.mxu0
    %v902 = vrcp.pop %v853
    %v903 = vrcp.pop %v856
    %v904 = vmul.f32 %v896, %v902
    %v905 = vmul.f32 %v899, %v903
    %v906 = vpack.c.bf16 %v905, %v904
    %v915 = vunpack.c.l.b16 %v651
    %v916 = vunpack.c.l.b16 %v652
    %v917 = vunpack.c.l.b16 %v653
    %v918 = vunpack.c.l.b16 %v654
    %v919 = vunpack.c.l.b16 %v655
    %v920 = vunpack.c.l.b16 %v656
    %v921 = vunpack.c.l.b16 %v657
    %v922 = vunpack.c.l.b16 %v658
    %v923 = vpack.c.b16 %v916, %v915
    %v924 = vpack.c.b16 %v918, %v917
    %v925 = vpack.c.b16 %v920, %v919
    %v926 = vpack.c.b16 %v922, %v921
    %v932 = vsel %vm675, %v906, 0
    %934 = vmatprep.subr.bf16.mxu0 0
    %935 = vmatpush1.bf16.msra.mxu0 %v923
    %936 = vmatprep.subr.bf16.mxu0 0
    %937 = vmatpush1.bf16.msra.mxu0 %v924
    %938 = vmatprep.subr.bf16.mxu0 0
    %939 = vmatpush1.bf16.msra.mxu0 %v925
    %940 = vmatprep.subr.bf16.mxu0 0
    %941 = vmatpush1.bf16.msra.mxu0 %v926
    %942 = vmatprep.subr.bf16.mxu0 0
    %943 = vmatpush1.bf16.msra.mxu0 0
    %944 = vmatprep.subr.bf16.mxu0 0
    %945 = vmatpush1.bf16.msra.mxu0 0
    %946 = vmatprep.subr.bf16.mxu0 0
    %947 = vmatpush1.bf16.msra.mxu0 0
    %948 = vmatprep.subr.bf16.mxu0 0
    %949 = vmatpush1.bf16.msra.mxu0 0
    %950 = vmatprep.subr.bf16.mxu0 0
    %951 = vmatpush1.bf16.msra.mxu0 0
    %952 = vmatprep.subr.bf16.mxu0 0
    %953 = vmatpush1.bf16.msra.mxu0 0
    %954 = vmatprep.subr.bf16.mxu0 0
    %955 = vmatpush1.bf16.msra.mxu0 0
    %956 = vmatprep.subr.bf16.mxu0 0
    %957 = vmatpush1.bf16.msra.mxu0 0
    %958 = vmatprep.subr.bf16.mxu0 0
    %959 = vmatpush1.bf16.msra.mxu0 0
    %960 = vmatprep.subr.bf16.mxu0 0
    %961 = vmatpush1.bf16.msra.mxu0 0
    %962 = vmatprep.subr.bf16.mxu0 0
    %963 = vmatpush1.bf16.msra.mxu0 0
    %964 = vmatprep.subr.bf16.mxu0 0
    %965 = vmatpush1.bf16.msra.mxu0 0
    %966 = vmatprep.mubr.bf16.mxu0 0
    %967 = vmatmul.mubr.bf16.gmra.mrb[0].mxu0 %v932
    %v968 = vpop.f32.mrb[0].mxu0
    %v969 = vadd.f32 0.0, %v968
    %v970 = vpop.f32.mrb[0].mxu0
    %v971 = vpop.f32.mrb[0].mxu0
    %v972 = vadd.f32 0.0, %v971
    %v973 = vpop.f32.mrb[0].mxu0
    %974 = vdwg.mxu0
    %v983 = vunpack.c.l.b16 %v643
    %v984 = vunpack.c.l.b16 %v644
    %v985 = vunpack.c.l.b16 %v645
    %v986 = vunpack.c.l.b16 %v646
    %v987 = vunpack.c.l.b16 %v647
    %v988 = vunpack.c.l.b16 %v648
    %v989 = vunpack.c.l.b16 %v649
    %v990 = vunpack.c.l.b16 %v650
    %v991 = vpack.c.b16 %v984, %v983
    %v992 = vpack.c.b16 %v986, %v985
    %v993 = vpack.c.b16 %v988, %v987
    %v994 = vpack.c.b16 %v990, %v989
    %v1000 = vsel %vm675, %v791, 0
    %1002 = vmatprep.subr.bf16.mxu0 0
    %1003 = vmatpush1.bf16.msra.mxu0 %v991
    %1004 = vmatprep.subr.bf16.mxu0 0
    %1005 = vmatpush1.bf16.msra.mxu0 %v992
    %1006 = vmatprep.subr.bf16.mxu0 0
    %1007 = vmatpush1.bf16.msra.mxu0 %v993
    %1008 = vmatprep.subr.bf16.mxu0 0
    %1009 = vmatpush1.bf16.msra.mxu0 %v994
    %1010 = vmatprep.subr.bf16.mxu0 0
    %1011 = vmatpush1.bf16.msra.mxu0 0
    %1012 = vmatprep.subr.bf16.mxu0 0
    %1013 = vmatpush1.bf16.msra.mxu0 0
    %1014 = vmatprep.subr.bf16.mxu0 0
    %1015 = vmatpush1.bf16.msra.mxu0 0
    %1016 = vmatprep.subr.bf16.mxu0 0
    %1017 = vmatpush1.bf16.msra.mxu0 0
    %1018 = vmatprep.subr.bf16.mxu0 0
    %1019 = vmatpush1.bf16.msra.mxu0 0
    %1020 = vmatprep.subr.bf16.mxu0 0
    %1021 = vmatpush1.bf16.msra.mxu0 0
    %1022 = vmatprep.subr.bf16.mxu0 0
    %1023 = vmatpush1.bf16.msra.mxu0 0
    %1024 = vmatprep.subr.bf16.mxu0 0
    %1025 = vmatpush1.bf16.msra.mxu0 0
    %1026 = vmatprep.subr.bf16.mxu0 0
    %1027 = vmatpush1.bf16.msra.mxu0 0
    %1028 = vmatprep.subr.bf16.mxu0 0
    %1029 = vmatpush1.bf16.msra.mxu0 0
    %1030 = vmatprep.subr.bf16.mxu0 0
    %1031 = vmatpush1.bf16.msra.mxu0 0
    %1032 = vmatprep.subr.bf16.mxu0 0
    %1033 = vmatpush1.bf16.msra.mxu0 0
    %1034 = vmatprep.mubr.bf16.mxu0 0
    %1035 = vmatmul.mubr.bf16.gmra.mrb[0].mxu0 %v1000
    %v1036 = vpop.f32.mrb[0].mxu0
    %v1037 = vadd.f32 %v969, %v1036
    %v1038 = vpop.f32.mrb[0].mxu0
    %v1039 = vpop.f32.mrb[0].mxu0
    %v1040 = vadd.f32 %v972, %v1039
    %v1041 = vpop.f32.mrb[0].mxu0
    %1042 = vdwg.mxu0
    %1044 = vrot.lane.b32.xlu0 %v641, 64
    %v1045 = vpop.permute.xlu0 %1044
    %v1047 = vsel %vm675, %v640, 0
    %v1050 = vsel %vm675, %v1045, 0
    %1052 = vmatprep.subr.bf16.mxu0 0
    %1053 = vmatpush1.bf16.xpose.msra.mxu0 %v1050
    %1054 = vmatprep.subr.bf16.mxu0 0
    %1055 = vmatpush1.bf16.xpose.msra.mxu0 0
    %1056 = vmatprep.subr.bf16.mxu0 0
    %1057 = vmatpush1.bf16.xpose.msra.mxu0 0
    %1058 = vmatprep.subr.bf16.mxu0 0
    %1059 = vmatpush1.bf16.xpose.msra.mxu0 0
    %1060 = vmatprep.subr.bf16.mxu0 0
    %1061 = vmatpush1.bf16.xpose.msra.mxu0 0
    %1062 = vmatprep.subr.bf16.mxu0 0
    %1063 = vmatpush1.bf16.xpose.msra.mxu0 0
    %1064 = vmatprep.subr.bf16.mxu0 0
    %1065 = vmatpush1.bf16.xpose.msra.mxu0 0
    %1066 = vmatprep.subr.bf16.mxu0 0
    %1067 = vmatpush1.bf16.xpose.msra.mxu0 0
    %1068 = vmatprep.subr.bf16.mxu0 0
    %1069 = vmatpush1.bf16.xpose.msra.mxu0 0
    %1070 = vmatprep.subr.bf16.mxu0 0
    %1071 = vmatpush1.bf16.xpose.msra.mxu0 0
    %1072 = vmatprep.subr.bf16.mxu0 0
    %1073 = vmatpush1.bf16.xpose.msra.mxu0 0
    %1074 = vmatprep.subr.bf16.mxu0 0
    %1075 = vmatpush1.bf16.xpose.msra.mxu0 0
    %1076 = vmatprep.subr.bf16.mxu0 0
    %1077 = vmatpush1.bf16.xpose.msra.mxu0 0
    %1078 = vmatprep.subr.bf16.mxu0 0
    %1079 = vmatpush1.bf16.xpose.msra.mxu0 0
    %1080 = vmatprep.subr.bf16.mxu0 0
    %1081 = vmatpush1.bf16.xpose.msra.mxu0 0
    %1082 = vmatprep.subr.bf16.mxu0 0
    %1083 = vmatpush1.bf16.xpose.msra.mxu0 0
    %1084 = vmatprep.mubr.bf16.mxu0 0
    %1085 = vmatmul.mubr.bf16.gmra.mrb[0].mxu0 %v1047
    %v1086 = vpop.f32.mrb[0].mxu0
    %v1087 = vadd.f32 %v637, %v1086
    %v1088 = vpop.f32.mrb[0].mxu0
    %v1089 = vpop.f32.mrb[0].mxu0
    %v1090 = vadd.f32 %v638, %v1089
    %v1091 = vpop.f32.mrb[0].mxu0
    %1092 = vdwg.mxu0
    %v1093 = vsel %vm723, %v1087, -inf
    %1094 = vmax.xlane.f32.xlu0 %v1093
    %v1095 = vpop.xlane.xlu0 %1094
    %v1096 = vsel %vm723, %v1090, -inf
    %1097 = vmax.xlane.f32.xlu0 %v1096
    %v1098 = vpop.xlane.xlu0 %1097
    %v1099 = vsub.f32 %v1087, %v1095
    %v1100 = vsub.f32 %v1090, %v1098
    %v1101 = vmul.f32 %v1099, 1.442695
    %v1102 = vpow.pop %v1101
    %v1103 = vmul.f32 %v1100, 1.442695
    %v1104 = vpow.pop %v1103
    %v1105 = vsel %vm723, %v1102, 0.0
    %1106 = vadd.xlane.f32.xlu0 %v1105
    %v1107 = vpop.xlane.xlu0 %1106
    %v1108 = vsel %vm723, %v1104, 0.0
    %1109 = vadd.xlane.f32.xlu0 %v1108
    %v1110 = vpop.xlane.xlu0 %1109
    %v1111 = vpack.c.bf16 %v1104, %v1102
    %1113 = vrot.lane.b32.xlu0 %v642, 64
    %v1114 = vpop.permute.xlu0 %1113
    %v1117 = vsel %vm723, %v1111, 0
    %1119 = vmatprep.subr.bf16.mxu0 0
    %1120 = vmatpush1.bf16.msra.mxu0 %v1114
    %1121 = vmatprep.subr.bf16.mxu0 0
    %1122 = vmatpush1.bf16.msra.mxu0 0
    %1123 = vmatprep.subr.bf16.mxu0 0
    %1124 = vmatpush1.bf16.msra.mxu0 0
    %1125 = vmatprep.subr.bf16.mxu0 0
    %1126 = vmatpush1.bf16.msra.mxu0 0
    %1127 = vmatprep.subr.bf16.mxu0 0
    %1128 = vmatpush1.bf16.msra.mxu0 0
    %1129 = vmatprep.subr.bf16.mxu0 0
    %1130 = vmatpush1.bf16.msra.mxu0 0
    %1131 = vmatprep.subr.bf16.mxu0 0
    %1132 = vmatpush1.bf16.msra.mxu0 0
    %1133 = vmatprep.subr.bf16.mxu0 0
    %1134 = vmatpush1.bf16.msra.mxu0 0
    %1135 = vmatprep.subr.bf16.mxu0 0
    %1136 = vmatpush1.bf16.msra.mxu0 0
    %1137 = vmatprep.subr.bf16.mxu0 0
    %1138 = vmatpush1.bf16.msra.mxu0 0
    %1139 = vmatprep.subr.bf16.mxu0 0
    %1140 = vmatpush1.bf16.msra.mxu0 0
    %1141 = vmatprep.subr.bf16.mxu0 0
    %1142 = vmatpush1.bf16.msra.mxu0 0
    %1143 = vmatprep.subr.bf16.mxu0 0
    %1144 = vmatpush1.bf16.msra.mxu0 0
    %1145 = vmatprep.subr.bf16.mxu0 0
    %1146 = vmatpush1.bf16.msra.mxu0 0
    %1147 = vmatprep.subr.bf16.mxu0 0
    %1148 = vmatpush1.bf16.msra.mxu0 0
    %1149 = vmatprep.subr.bf16.mxu0 0
    %1150 = vmatpush1.bf16.msra.mxu0 0
    %1151 = vmatprep.mubr.bf16.mxu0 0
    %1152 = vmatmul.mubr.bf16.gmra.mrb[0].mxu0 %v1117
    %v1153 = vpop.f32.mrb[0].mxu0
    %v1154 = vadd.f32 0.0, %v1153
    %v1155 = vpop.f32.mrb[0].mxu0
    %v1156 = vpop.f32.mrb[0].mxu0
    %v1157 = vadd.f32 0.0, %v1156
    %v1158 = vpop.f32.mrb[0].mxu0
    %1159 = vdwg.mxu0
    %v1160 = vrcp.pop %v1107
    %v1161 = vrcp.pop %v1110
    %v1162 = vmul.f32 %v1154, %v1160
    %v1163 = vmul.f32 %v1157, %v1161
    %v1164 = vpack.c.bf16 %v1163, %v1162
    %v1173 = vunpack.c.l.b16 %v659
    %v1174 = vunpack.c.l.b16 %v660
    %v1175 = vunpack.c.l.b16 %v661
    %v1176 = vunpack.c.l.b16 %v662
    %v1177 = vunpack.c.l.b16 %v663
    %v1178 = vunpack.c.l.b16 %v664
    %v1179 = vunpack.c.l.b16 %v665
    %v1180 = vunpack.c.l.b16 %v666
    %v1181 = vpack.c.b16 %v1174, %v1173
    %v1182 = vpack.c.b16 %v1176, %v1175
    %v1183 = vpack.c.b16 %v1178, %v1177
    %v1184 = vpack.c.b16 %v1180, %v1179
    %v1190 = vsel %vm675, %v1164, 0
    %1192 = vmatprep.subr.bf16.mxu0 0
    %1193 = vmatpush1.bf16.msra.mxu0 %v1181
    %1194 = vmatprep.subr.bf16.mxu0 0
    %1195 = vmatpush1.bf16.msra.mxu0 %v1182
    %1196 = vmatprep.subr.bf16.mxu0 0
    %1197 = vmatpush1.bf16.msra.mxu0 %v1183
    %1198 = vmatprep.subr.bf16.mxu0 0
    %1199 = vmatpush1.bf16.msra.mxu0 %v1184
    %1200 = vmatprep.subr.bf16.mxu0 0
    %1201 = vmatpush1.bf16.msra.mxu0 0
    %1202 = vmatprep.subr.bf16.mxu0 0
    %1203 = vmatpush1.bf16.msra.mxu0 0
    %1204 = vmatprep.subr.bf16.mxu0 0
    %1205 = vmatpush1.bf16.msra.mxu0 0
    %1206 = vmatprep.subr.bf16.mxu0 0
    %1207 = vmatpush1.bf16.msra.mxu0 0
    %1208 = vmatprep.subr.bf16.mxu0 0
    %1209 = vmatpush1.bf16.msra.mxu0 0
    %1210 = vmatprep.subr.bf16.mxu0 0
    %1211 = vmatpush1.bf16.msra.mxu0 0
    %1212 = vmatprep.subr.bf16.mxu0 0
    %1213 = vmatpush1.bf16.msra.mxu0 0
    %1214 = vmatprep.subr.bf16.mxu0 0
    %1215 = vmatpush1.bf16.msra.mxu0 0
    %1216 = vmatprep.subr.bf16.mxu0 0
    %1217 = vmatpush1.bf16.msra.mxu0 0
    %1218 = vmatprep.subr.bf16.mxu0 0
    %1219 = vmatpush1.bf16.msra.mxu0 0
    %1220 = vmatprep.subr.bf16.mxu0 0
    %1221 = vmatpush1.bf16.msra.mxu0 0
    %1222 = vmatprep.subr.bf16.mxu0 0
    %1223 = vmatpush1.bf16.msra.mxu0 0
    %1224 = vmatprep.mubr.bf16.mxu0 0
    %1225 = vmatmul.mubr.bf16.gmra.mrb[0].mxu0 %v1190
    %v1226 = vpop.f32.mrb[0].mxu0
    %v1227 = vadd.f32 0.0, %v1226
    %v1228 = vpop.f32.mrb[0].mxu0
    %v1229 = vpop.f32.mrb[0].mxu0
    %v1230 = vadd.f32 0.0, %v1229
    %v1231 = vpop.f32.mrb[0].mxu0
    %1232 = vdwg.mxu0
    %v1233 = vadd.f32 %v1037, %v1227
    %v1234 = vadd.f32 %v1040, %v1230
    %1236 = vrot.lane.b32.xlu0 %v640, 64
    %v1237 = vpop.permute.xlu0 %1236
    %v1239 = vsel %vm675, %v1237, 0
    %1241 = vmatprep.subr.bf16.mxu0 0
    %1242 = vmatpush1.bf16.xpose.msra.mxu0 %v1050
    %1243 = vmatprep.subr.bf16.mxu0 0
    %1244 = vmatpush1.bf16.xpose.msra.mxu0 0
    %1245 = vmatprep.subr.bf16.mxu0 0
    %1246 = vmatpush1.bf16.xpose.msra.mxu0 0
    %1247 = vmatprep.subr.bf16.mxu0 0
    %1248 = vmatpush1.bf16.xpose.msra.mxu0 0
    %1249 = vmatprep.subr.bf16.mxu0 0
    %1250 = vmatpush1.bf16.xpose.msra.mxu0 0
    %1251 = vmatprep.subr.bf16.mxu0 0
    %1252 = vmatpush1.bf16.xpose.msra.mxu0 0
    %1253 = vmatprep.subr.bf16.mxu0 0
    %1254 = vmatpush1.bf16.xpose.msra.mxu0 0
    %1255 = vmatprep.subr.bf16.mxu0 0
    %1256 = vmatpush1.bf16.xpose.msra.mxu0 0
    %1257 = vmatprep.subr.bf16.mxu0 0
    %1258 = vmatpush1.bf16.xpose.msra.mxu0 0
    %1259 = vmatprep.subr.bf16.mxu0 0
    %1260 = vmatpush1.bf16.xpose.msra.mxu0 0
    %1261 = vmatprep.subr.bf16.mxu0 0
    %1262 = vmatpush1.bf16.xpose.msra.mxu0 0
    %1263 = vmatprep.subr.bf16.mxu0 0
    %1264 = vmatpush1.bf16.xpose.msra.mxu0 0
    %1265 = vmatprep.subr.bf16.mxu0 0
    %1266 = vmatpush1.bf16.xpose.msra.mxu0 0
    %1267 = vmatprep.subr.bf16.mxu0 0
    %1268 = vmatpush1.bf16.xpose.msra.mxu0 0
    %1269 = vmatprep.subr.bf16.mxu0 0
    %1270 = vmatpush1.bf16.xpose.msra.mxu0 0
    %1271 = vmatprep.subr.bf16.mxu0 0
    %1272 = vmatpush1.bf16.xpose.msra.mxu0 0
    %1273 = vmatprep.mubr.bf16.mxu0 0
    %1274 = vmatmul.mubr.bf16.gmra.mrb[0].mxu0 %v1239
    %v1275 = vpop.f32.mrb[0].mxu0
    %v1276 = vadd.f32 %v637, %v1275
    %v1277 = vpop.f32.mrb[0].mxu0
    %v1278 = vpop.f32.mrb[0].mxu0
    %v1279 = vadd.f32 %v638, %v1278
    %v1280 = vpop.f32.mrb[0].mxu0
    %1281 = vdwg.mxu0
    %v1282 = vsel %vm723, %v1276, -inf
    %1283 = vmax.xlane.f32.xlu0 %v1282
    %v1284 = vpop.xlane.xlu0 %1283
    %v1285 = vsel %vm723, %v1279, -inf
    %1286 = vmax.xlane.f32.xlu0 %v1285
    %v1287 = vpop.xlane.xlu0 %1286
    %v1288 = vsub.f32 %v1276, %v1284
    %v1289 = vsub.f32 %v1279, %v1287
    %v1290 = vmul.f32 %v1288, 1.442695
    %v1291 = vpow.pop %v1290
    %v1292 = vmul.f32 %v1289, 1.442695
    %v1293 = vpow.pop %v1292
    %v1294 = vsel %vm723, %v1291, 0.0
    %1295 = vadd.xlane.f32.xlu0 %v1294
    %v1296 = vpop.xlane.xlu0 %1295
    %v1297 = vsel %vm723, %v1293, 0.0
    %1298 = vadd.xlane.f32.xlu0 %v1297
    %v1299 = vpop.xlane.xlu0 %1298
    %v1300 = vpack.c.bf16 %v1293, %v1291
    %v1302 = vsel %vm723, %v1300, 0
    %1304 = vmatprep.subr.bf16.mxu0 0
    %1305 = vmatpush1.bf16.msra.mxu0 %v1114
    %1306 = vmatprep.subr.bf16.mxu0 0
    %1307 = vmatpush1.bf16.msra.mxu0 0
    %1308 = vmatprep.subr.bf16.mxu0 0
    %1309 = vmatpush1.bf16.msra.mxu0 0
    %1310 = vmatprep.subr.bf16.mxu0 0
    %1311 = vmatpush1.bf16.msra.mxu0 0
    %1312 = vmatprep.subr.bf16.mxu0 0
    %1313 = vmatpush1.bf16.msra.mxu0 0
    %1314 = vmatprep.subr.bf16.mxu0 0
    %1315 = vmatpush1.bf16.msra.mxu0 0
    %1316 = vmatprep.subr.bf16.mxu0 0
    %1317 = vmatpush1.bf16.msra.mxu0 0
    %1318 = vmatprep.subr.bf16.mxu0 0
    %1319 = vmatpush1.bf16.msra.mxu0 0
    %1320 = vmatprep.subr.bf16.mxu0 0
    %1321 = vmatpush1.bf16.msra.mxu0 0
    %1322 = vmatprep.subr.bf16.mxu0 0
    %1323 = vmatpush1.bf16.msra.mxu0 0
    %1324 = vmatprep.subr.bf16.mxu0 0
    %1325 = vmatpush1.bf16.msra.mxu0 0
    %1326 = vmatprep.subr.bf16.mxu0 0
    %1327 = vmatpush1.bf16.msra.mxu0 0
    %1328 = vmatprep.subr.bf16.mxu0 0
    %1329 = vmatpush1.bf16.msra.mxu0 0
    %1330 = vmatprep.subr.bf16.mxu0 0
    %1331 = vmatpush1.bf16.msra.mxu0 0
    %1332 = vmatprep.subr.bf16.mxu0 0
    %1333 = vmatpush1.bf16.msra.mxu0 0
    %1334 = vmatprep.subr.bf16.mxu0 0
    %1335 = vmatpush1.bf16.msra.mxu0 0
    %1336 = vmatprep.mubr.bf16.mxu0 0
    %1337 = vmatmul.mubr.bf16.gmra.mrb[0].mxu0 %v1302
    %v1338 = vpop.f32.mrb[0].mxu0
    %v1339 = vadd.f32 0.0, %v1338
    %v1340 = vpop.f32.mrb[0].mxu0
    %v1341 = vpop.f32.mrb[0].mxu0
    %v1342 = vadd.f32 0.0, %v1341
    %v1343 = vpop.f32.mrb[0].mxu0
    %1344 = vdwg.mxu0
    %v1345 = vrcp.pop %v1296
    %v1346 = vrcp.pop %v1299
    %v1347 = vmul.f32 %v1339, %v1345
    %v1348 = vmul.f32 %v1342, %v1346
    %v1349 = vpack.c.bf16 %v1348, %v1347
    %v1358 = vunpack.c.l.b16 %v667
    %v1359 = vunpack.c.l.b16 %v668
    %v1360 = vunpack.c.l.b16 %v669
    %v1361 = vunpack.c.l.b16 %v670
    %v1362 = vunpack.c.l.b16 %v671
    %v1363 = vunpack.c.l.b16 %v672
    %v1364 = vunpack.c.l.b16 %v673
    %v1365 = vunpack.c.l.b16 %v674
    %v1366 = vpack.c.b16 %v1359, %v1358
    %v1367 = vpack.c.b16 %v1361, %v1360
    %v1368 = vpack.c.b16 %v1363, %v1362
    %v1369 = vpack.c.b16 %v1365, %v1364
    %v1375 = vsel %vm675, %v1349, 0
    %1377 = vmatprep.subr.bf16.mxu0 0
    %1378 = vmatpush1.bf16.msra.mxu0 %v1366
    %1379 = vmatprep.subr.bf16.mxu0 0
    %1380 = vmatpush1.bf16.msra.mxu0 %v1367
    %1381 = vmatprep.subr.bf16.mxu0 0
    %1382 = vmatpush1.bf16.msra.mxu0 %v1368
    %1383 = vmatprep.subr.bf16.mxu0 0
    %1384 = vmatpush1.bf16.msra.mxu0 %v1369
    %1385 = vmatprep.subr.bf16.mxu0 0
    %1386 = vmatpush1.bf16.msra.mxu0 0
    %1387 = vmatprep.subr.bf16.mxu0 0
    %1388 = vmatpush1.bf16.msra.mxu0 0
    %1389 = vmatprep.subr.bf16.mxu0 0
    %1390 = vmatpush1.bf16.msra.mxu0 0
    %1391 = vmatprep.subr.bf16.mxu0 0
    %1392 = vmatpush1.bf16.msra.mxu0 0
    %1393 = vmatprep.subr.bf16.mxu0 0
    %1394 = vmatpush1.bf16.msra.mxu0 0
    %1395 = vmatprep.subr.bf16.mxu0 0
    %1396 = vmatpush1.bf16.msra.mxu0 0
    %1397 = vmatprep.subr.bf16.mxu0 0
    %1398 = vmatpush1.bf16.msra.mxu0 0
    %1399 = vmatprep.subr.bf16.mxu0 0
    %1400 = vmatpush1.bf16.msra.mxu0 0
    %1401 = vmatprep.subr.bf16.mxu0 0
    %1402 = vmatpush1.bf16.msra.mxu0 0
    %1403 = vmatprep.subr.bf16.mxu0 0
    %1404 = vmatpush1.bf16.msra.mxu0 0
    %1405 = vmatprep.subr.bf16.mxu0 0
    %1406 = vmatpush1.bf16.msra.mxu0 0
    %1407 = vmatprep.subr.bf16.mxu0 0
    %1408 = vmatpush1.bf16.msra.mxu0 0
    %1409 = vmatprep.mubr.bf16.mxu0 0
    %1410 = vmatmul.mubr.bf16.gmra.mrb[0].mxu0 %v1375
    %v1411 = vpop.f32.mrb[0].mxu0
    %v1412 = vadd.f32 0.0, %v1411
    %v1413 = vpop.f32.mrb[0].mxu0
    %v1414 = vpop.f32.mrb[0].mxu0
    %v1415 = vadd.f32 0.0, %v1414
    %v1416 = vpop.f32.mrb[0].mxu0
    %1417 = vdwg.mxu0
    %v1418 = vadd.f32 %v1233, %v1412
    %v1419 = vadd.f32 %v1234, %v1415
    %1420 = vst [vmem:[#allocation10] sm:$0xff] %v1418
    %1421 = vst [vmem:[#allocation10 + $0x8] sm:$0xff] %v1419
    // Predicated region
    $region34: #{tpu_custom_call.1} parent=1 // pred_check
      _
    $region35: #{tpu_custom_call.1} parent=1 // pred_check_branch
      %1423 = sbr.rel (0) target = $region37
    $region36: #{tpu_custom_call.1} parent=1 // pred_region
      %s1425 = ssub.s32 256, 256
      %1426 = vsyncadd [#allocation4], %s1425
      %s1427 = sshll.u32 [#allocation10], 4
      %s1428 = int_to_ptr.vmem [resolvable:$true] %s1427
      %1433 = dma.vmem_to_hbm [thread:$0]  %s1428, 256, %s4, [#allocation4], 128, 128, 8
    $region37: #{tpu_custom_call.1} parent=1 // pred_fallthru
      _
    // Predicated region
    $region38: #{tpu_custom_call.1} parent=1 // pred_check
      _
    $region39: #{tpu_custom_call.1} parent=1 // pred_check_branch
      %1435 = sbr.rel (0) target = $region41
    $region40: #{tpu_custom_call.1} parent=1 // pred_region
      %1436 = dma.done [#allocation4], 256
    $region41: #{tpu_custom_call.1} parent=1 // pred_fallthru
      _
    %1437 = vsyncpa [#allocation3], 1
    %1438 = vsyncpa [#allocation6], 1
    %1439 = vsyncpa [#allocation9], 1
    %1440 = vsyncpa [#allocation4], 1

</llo_original>
